<compile_context>
chip_gen: v7x
topology: tpu7x:2x2x1
jax: 0.10.0
libtpu: 0.0.40
codegen_flags: <defaults>
</compile_context>

<pallas_src>
import functools

import jax
import jax.numpy as jnp
from jax import lax
from jax.experimental import pallas as pl
from jax.experimental.pallas import tpu as pltpu

EPS = 1e-5

# Set to jnp.bfloat16 on v5e/v6e/v7x for full MXU rate (results then differ from
# the f32 reference at the ~1e-2 level).  BN statistics are always f32.
MXU_DTYPE = jnp.float32


# ----------------------------- fused kernel ----------------------------------

def _double_conv_kernel(x_ref, su_ref, sd_ref, w1_ref, w2_ref, fold_ref,
                        g1_ref, b1_ref, g2_ref, b2_ref, o_ref, *, inv_count):
    # x_ref   : (N*H, W*Cin)    lane-dense flattened batch
    # su_ref  : (N*H, N*H)      0/1 shift matrix for the dy=0 tap (row above)
    # sd_ref  : (N*H, N*H)      0/1 shift matrix for the dy=2 tap (row below)
    # w1_ref  : (3, W*Cin, W*Cout)  banded conv1 weights (one matrix per dy)
    # w2_ref  : (3, W*Cout, W*Cout) banded conv2 weights
    # fold_ref: (W*Cout, W*Cout)    channel-fold matrix (sum over W copies)
    # g*/b*   : (1, W*Cout)     BN gamma/beta tiled over W (lane-dense)
    # o_ref   : (N*H, W*Cout)   final output slab
    su = su_ref[...]
    sd = sd_ref[...]
    fold = fold_ref[...]

    def conv(h, w_ref):
        # 3x3 conv = 3 banded matmuls over dy; the dy row shift + zero padding
        # + cross-sample isolation live in the tiny shift matmuls su/sd.
        z0 = jnp.dot(h, w_ref[0], preferred_element_type=jnp.float32)
        z1 = jnp.dot(h, w_ref[1], preferred_element_type=jnp.float32)
        z2 = jnp.dot(h, w_ref[2], preferred_element_type=jnp.float32)
        return (jnp.dot(su, z0, preferred_element_type=jnp.float32)
                + z1
                + jnp.dot(sd, z2, preferred_element_type=jnp.float32))

    def bn_relu(y, g_ref, b_ref):
        # Train-mode BN over the whole batch, computed in-kernel:
        # fold the W lane-copies of each channel with one matmul, reduce rows,
        # then one fused scale/shift/ReLU pass.  All stats in f32.
        mean = jnp.sum(jnp.dot(y, fold, preferred_element_type=jnp.float32),
                       axis=0, keepdims=True) * inv_count
        meansq = jnp.sum(jnp.dot(y * y, fold, preferred_element_type=jnp.float32),
                         axis=0, keepdims=True) * inv_count
        var = meansq - mean * mean              # biased, train-mode BN
        a = g_ref[...] * lax.rsqrt(var + EPS)
        c = b_ref[...] - mean * a
        return jnp.maximum(y * a + c, 0.0)

    y1 = conv(x_ref[...].astype(MXU_DTYPE), w1_ref)   # conv1 (bias folded into BN)
    h1 = bn_relu(y1, g1_ref, b1_ref)                  # BN1 + ReLU
    y2 = conv(h1.astype(MXU_DTYPE), w2_ref)           # conv2
    o_ref[...] = bn_relu(y2, g2_ref, b2_ref)          # BN2 + ReLU


# ----------------------------- wrapper helpers --------------------------------

def _banded_weight(w, W):
    """PyTorch conv weight (Cout, Cin, 3, 3) -> (3, W*Cin, W*Cout) banded matrices.

    Matrix dy computes, for every output column w and channel co,
    sum_{dx, ci} x[:, w + dx - 1, ci] * w[co, ci, dy, dx]; out-of-range columns
    are dropped (== zero padding along W).  The contraction depth becomes W*Cin
    so the whole W axis rides the MXU and no im2col copies are needed.
    """
    wt = jnp.transpose(w, (2, 3, 1, 0)).astype(jnp.float32)  # (dy, dx, Cin, Cout)
    Cin, Cout = wt.shape[2], wt.shape[3]
    mats = []
    for dy in range(3):
        m = jnp.zeros((W * Cin, W * Cout), jnp.float32)
        for dx in range(3):
            m = m + jnp.kron(jnp.eye(W, k=1 - dx, dtype=jnp.float32), wt[dy, dx])
        mats.append(m)
    return jnp.stack(mats).astype(MXU_DTYPE)


def _shift_matrices(N, H):
    """0/1 matrices S_up/S_dn s.t. (S_up @ z)[r] = z[r-1] (clipped at image/sample
    boundaries) and (S_dn @ z)[r] = z[r+1] (clipped), for the flattened (N*H) rows.
    They encode the dy taps' row shift, the zero padding at h=0/h=H-1, and the
    cross-sample isolation of the batch-folded layout, all as MXU work."""
    NH = N * H
    r = jnp.arange(NH)
    not_first = ((r % H) != 0).astype(jnp.float32)[:, None]
    not_last = ((r % H) != (H - 1)).astype(jnp.float32)[:, None]
    s_up = jnp.eye(NH, k=-1, dtype=jnp.float32) * not_first
    s_dn = jnp.eye(NH, k=1, dtype=jnp.float32) * not_last
    return s_up, s_dn


# ----------------------------- public entry ----------------------------------

@jax.jit
def double_conv(x_nchw, params):
    """Forward pass of DoubleConv.  x_nchw: (N, Cin, H, W) float32 (PyTorch layout)."""
    N, Cin, H, W = x_nchw.shape
    Cout = params["w1"].shape[0]
    NH, WCi, WCo = N * H, W * Cin, W * Cout
    inv_count = 1.0 / float(N * H * W)

    # NCHW -> lane-dense flattened batch (N*H, W*Cin).
    x2d = jnp.transpose(x_nchw, (0, 2, 3, 1)).reshape(NH, WCi)

    # Conv biases b1/b2 are intentionally unused: train-mode BN cancels them.
    w1b = _banded_weight(params["w1"], W)          # (3, W*Cin, W*Cout)
    w2b = _banded_weight(params["w2"], W)          # (3, W*Cout, W*Cout)
    s_up, s_dn = _shift_matrices(N, H)             # (N*H, N*H) each
    fold = jnp.kron(jnp.ones((W, W), jnp.float32),
                    jnp.eye(Cout, dtype=jnp.float32))   # (W*Cout, W*Cout)

    g1t = jnp.tile(params["g1"], W).reshape(1, WCo)
    b1t = jnp.tile(params["bt1"], W).reshape(1, WCo)
    g2t = jnp.tile(params["g2"], W).reshape(1, WCo)
    b2t = jnp.tile(params["bt2"], W).reshape(1, WCo)

    vmem_spec = pl.BlockSpec(memory_space=pltpu.MemorySpace.VMEM)
    out2d = pl.pallas_call(
        functools.partial(_double_conv_kernel, inv_count=inv_count),
        out_shape=jax.ShapeDtypeStruct((NH, WCo), jnp.float32),
        in_specs=[vmem_spec] * 10,
        out_specs=vmem_spec,
    )(x2d, s_up, s_dn, w1b, w2b, fold, g1t, b1t, g2t, b2t)

    # back to PyTorch NCHW
    return jnp.transpose(out2d.reshape(N, H, W, Cout), (0, 3, 1, 2))


# ----------------------------- reference & test -------------------------------

def reference_double_conv(x, p):
    """Pure-JAX reference mirroring the PyTorch module (train-mode BN, with bias)."""
    def conv(x, w, b):
        y = lax.conv_general_dilated(
            x, w, window_strides=(1, 1), padding="SAME",
            dimension_numbers=("NCHW", "OIHW", "NCHW"))
        return y + b[None, :, None, None]

    def bn_relu(y, g, bt):
        m = jnp.mean(y, axis=(0, 2, 3), keepdims=True)
        v = jnp.mean((y - m) ** 2, axis=(0, 2, 3), keepdims=True)
        y = (y - m) * lax.rsqrt(v + EPS)
        y = y * g[None, :, None, None] + bt[None, :, None, None]
        return jnp.maximum(y, 0.0)

    y = bn_relu(conv(x, p["w1"], p["b1"]), p["g1"], p["bt1"])
    y = bn_relu(conv(y, p["w2"], p["b2"]), p["g2"], p["bt2"])
    return y


def init_params(key, in_channels, out_channels):
    ks = jax.random.split(key, 8)
    return {
        "w1": 0.1 * jax.random.normal(ks[0], (out_channels, in_channels, 3, 3), jnp.float32),
        "b1": 0.05 * jax.random.normal(ks[1], (out_channels,), jnp.float32),
        "g1": 1.0 + 0.1 * jax.random.normal(ks[2], (out_channels,), jnp.float32),
        "bt1": 0.1 * jax.random.normal(ks[3], (out_channels,), jnp.float32),
        "w2": 0.1 * jax.random.normal(ks[4], (out_channels, out_channels, 3, 3), jnp.float32),
        "b2": 0.05 * jax.random.normal(ks[5], (out_channels,), jnp.float32),
        "g2": 1.0 + 0.1 * jax.random.normal(ks[6], (out_channels,), jnp.float32),
        "bt2": 0.1 * jax.random.normal(ks[7], (out_channels,), jnp.float32),
    }


if __name__ == "__main__":
    import numpy as np

    key = jax.random.PRNGKey(0)
    k_x, k_p = jax.random.split(key)

    N, Cin, Cout, H, W = 2, 4, 8, 16, 16
    x = jax.random.normal(k_x, (N, Cin, H, W), jnp.float32)
    params = init_params(k_p, Cin, Cout)

    out = jax.block_until_ready(double_conv(x, params))
    ref = jax.block_until_ready(reference_double_conv(x, params))

    np.testing.assert_allclose(np.asarray(out), np.asarray(ref),
                               rtol=1e-3, atol=1e-3)
    print("KERNEL_OK")
</pallas_src>

<mosaic_0001>
module attributes {stable_mosaic.version = 11 : i64} {
  func.func @_double_conv_kernel(%arg0: memref<32x64xf32, #tpu.memory_space<vmem>>, %arg1: memref<32x32xf32, #tpu.memory_space<vmem>>, %arg2: memref<32x32xf32, #tpu.memory_space<vmem>>, %arg3: memref<3x64x128xf32, #tpu.memory_space<vmem>>, %arg4: memref<3x128x128xf32, #tpu.memory_space<vmem>>, %arg5: memref<128x128xf32, #tpu.memory_space<vmem>>, %arg6: memref<1x128xf32, #tpu.memory_space<vmem>>, %arg7: memref<1x128xf32, #tpu.memory_space<vmem>>, %arg8: memref<1x128xf32, #tpu.memory_space<vmem>>, %arg9: memref<1x128xf32, #tpu.memory_space<vmem>>, %arg10: memref<32x128xf32, #tpu.memory_space<vmem>>) attributes {dimension_semantics = [], scalar_prefetch = 0 : i64, scratch_operands = 0 : i64, tpu.core_type = #tpu.core_type<tc>} {
    %c0 = arith.constant 0 : index
    %c0_0 = arith.constant 0 : index
    %0 = vector.load %arg1[%c0, %c0_0] : memref<32x32xf32, #tpu.memory_space<vmem>>, vector<32x32xf32>
    %c0_1 = arith.constant 0 : index
    %c0_2 = arith.constant 0 : index
    %1 = vector.load %arg2[%c0_1, %c0_2] : memref<32x32xf32, #tpu.memory_space<vmem>>, vector<32x32xf32>
    %c0_3 = arith.constant 0 : index
    %c0_4 = arith.constant 0 : index
    %2 = vector.load %arg5[%c0_3, %c0_4] : memref<128x128xf32, #tpu.memory_space<vmem>>, vector<128x128xf32>
    %c0_5 = arith.constant 0 : index
    %c0_6 = arith.constant 0 : index
    %3 = vector.load %arg0[%c0_5, %c0_6] : memref<32x64xf32, #tpu.memory_space<vmem>>, vector<32x64xf32>
    %c0_7 = arith.constant 0 : index
    %c0_8 = arith.constant 0 : index
    %c0_9 = arith.constant 0 : index
    %4 = vector.load %arg3[%c0_7, %c0_8, %c0_9] : memref<3x64x128xf32, #tpu.memory_space<vmem>>, vector<1x64x128xf32>
    %5 = vector.shape_cast %4 : vector<1x64x128xf32> to vector<64x128xf32>
    %cst = arith.constant dense<0.000000e+00> : vector<32x128xf32>
    %6 = tpu.matmul %3, %5, %cst {dimension_numbers = #tpu.dot_dimension_numbers<[1], [0], [0], [1], [0, 0, 1, 1], [], []>} : vector<32x64xf32>, vector<64x128xf32>, vector<32x128xf32> -> vector<32x128xf32>
    %c1 = arith.constant 1 : index
    %c0_10 = arith.constant 0 : index
    %c0_11 = arith.constant 0 : index
    %7 = vector.load %arg3[%c1, %c0_10, %c0_11] : memref<3x64x128xf32, #tpu.memory_space<vmem>>, vector<1x64x128xf32>
    %8 = vector.shape_cast %7 : vector<1x64x128xf32> to vector<64x128xf32>
    %cst_12 = arith.constant dense<0.000000e+00> : vector<32x128xf32>
    %9 = tpu.matmul %3, %8, %cst_12 {dimension_numbers = #tpu.dot_dimension_numbers<[1], [0], [0], [1], [0, 0, 1, 1], [], []>} : vector<32x64xf32>, vector<64x128xf32>, vector<32x128xf32> -> vector<32x128xf32>
    %c2 = arith.constant 2 : index
    %c0_13 = arith.constant 0 : index
    %c0_14 = arith.constant 0 : index
    %10 = vector.load %arg3[%c2, %c0_13, %c0_14] : memref<3x64x128xf32, #tpu.memory_space<vmem>>, vector<1x64x128xf32>
    %11 = vector.shape_cast %10 : vector<1x64x128xf32> to vector<64x128xf32>
    %cst_15 = arith.constant dense<0.000000e+00> : vector<32x128xf32>
    %12 = tpu.matmul %3, %11, %cst_15 {dimension_numbers = #tpu.dot_dimension_numbers<[1], [0], [0], [1], [0, 0, 1, 1], [], []>} : vector<32x64xf32>, vector<64x128xf32>, vector<32x128xf32> -> vector<32x128xf32>
    %cst_16 = arith.constant dense<0.000000e+00> : vector<32x128xf32>
    %13 = tpu.matmul %0, %6, %cst_16 {dimension_numbers = #tpu.dot_dimension_numbers<[1], [0], [0], [1], [0, 0, 1, 1], [], []>} : vector<32x32xf32>, vector<32x128xf32>, vector<32x128xf32> -> vector<32x128xf32>
    %14 = arith.addf %13, %9 : vector<32x128xf32>
    %cst_17 = arith.constant dense<0.000000e+00> : vector<32x128xf32>
    %15 = tpu.matmul %1, %12, %cst_17 {dimension_numbers = #tpu.dot_dimension_numbers<[1], [0], [0], [1], [0, 0, 1, 1], [], []>} : vector<32x32xf32>, vector<32x128xf32>, vector<32x128xf32> -> vector<32x128xf32>
    %16 = arith.addf %14, %15 : vector<32x128xf32>
    %cst_18 = arith.constant dense<0.000000e+00> : vector<32x128xf32>
    %17 = tpu.matmul %16, %2, %cst_18 {dimension_numbers = #tpu.dot_dimension_numbers<[1], [0], [0], [1], [0, 0, 1, 1], [], []>} : vector<32x128xf32>, vector<128x128xf32>, vector<32x128xf32> -> vector<32x128xf32>
    %cst_19 = arith.constant dense<0.000000e+00> : vector<128xf32>
    %18 = vector.multi_reduction <add>, %17, %cst_19 [0] : vector<32x128xf32> to vector<128xf32>
    %19 = vector.shape_cast %18 : vector<128xf32> to vector<1x128xf32>
    %cst_20 = arith.constant 0.001953125 : f32
    %20 = vector.broadcast %cst_20 : f32 to vector<1x128xf32>
    %21 = arith.mulf %19, %20 : vector<1x128xf32>
    %22 = arith.mulf %16, %16 : vector<32x128xf32>
    %cst_21 = arith.constant dense<0.000000e+00> : vector<32x128xf32>
    %23 = tpu.matmul %22, %2, %cst_21 {dimension_numbers = #tpu.dot_dimension_numbers<[1], [0], [0], [1], [0, 0, 1, 1], [], []>} : vector<32x128xf32>, vector<128x128xf32>, vector<32x128xf32> -> vector<32x128xf32>
    %cst_22 = arith.constant dense<0.000000e+00> : vector<128xf32>
    %24 = vector.multi_reduction <add>, %23, %cst_22 [0] : vector<32x128xf32> to vector<128xf32>
    %25 = vector.shape_cast %24 : vector<128xf32> to vector<1x128xf32>
    %cst_23 = arith.constant 0.001953125 : f32
    %26 = vector.broadcast %cst_23 : f32 to vector<1x128xf32>
    %27 = arith.mulf %25, %26 : vector<1x128xf32>
    %28 = arith.mulf %21, %21 : vector<1x128xf32>
    %29 = arith.subf %27, %28 : vector<1x128xf32>
    %c0_24 = arith.constant 0 : index
    %c0_25 = arith.constant 0 : index
    %30 = vector.load %arg6[%c0_24, %c0_25] : memref<1x128xf32, #tpu.memory_space<vmem>>, vector<1x128xf32>
    %cst_26 = arith.constant 9.99999974E-6 : f32
    %31 = vector.broadcast %cst_26 : f32 to vector<1x128xf32>
    %32 = arith.addf %29, %31 : vector<1x128xf32>
    %33 = math.rsqrt %32 : vector<1x128xf32>
    %34 = arith.mulf %30, %33 : vector<1x128xf32>
    %c0_27 = arith.constant 0 : index
    %c0_28 = arith.constant 0 : index
    %35 = vector.load %arg7[%c0_27, %c0_28] : memref<1x128xf32, #tpu.memory_space<vmem>>, vector<1x128xf32>
    %36 = arith.mulf %21, %34 : vector<1x128xf32>
    %37 = arith.subf %35, %36 : vector<1x128xf32>
    %38 = vector.broadcast %34 : vector<1x128xf32> to vector<32x128xf32>
    %39 = arith.mulf %16, %38 : vector<32x128xf32>
    %40 = vector.broadcast %37 : vector<1x128xf32> to vector<32x128xf32>
    %41 = arith.addf %39, %40 : vector<32x128xf32>
    %cst_29 = arith.constant 0.000000e+00 : f32
    %42 = vector.broadcast %cst_29 : f32 to vector<32x128xf32>
    %43 = arith.maximumf %41, %42 : vector<32x128xf32>
    %c0_30 = arith.constant 0 : index
    %c0_31 = arith.constant 0 : index
    %c0_32 = arith.constant 0 : index
    %44 = vector.load %arg4[%c0_30, %c0_31, %c0_32] : memref<3x128x128xf32, #tpu.memory_space<vmem>>, vector<1x128x128xf32>
    %45 = vector.shape_cast %44 : vector<1x128x128xf32> to vector<128x128xf32>
    %cst_33 = arith.constant dense<0.000000e+00> : vector<32x128xf32>
    %46 = tpu.matmul %43, %45, %cst_33 {dimension_numbers = #tpu.dot_dimension_numbers<[1], [0], [0], [1], [0, 0, 1, 1], [], []>} : vector<32x128xf32>, vector<128x128xf32>, vector<32x128xf32> -> vector<32x128xf32>
    %c1_34 = arith.constant 1 : index
    %c0_35 = arith.constant 0 : index
    %c0_36 = arith.constant 0 : index
    %47 = vector.load %arg4[%c1_34, %c0_35, %c0_36] : memref<3x128x128xf32, #tpu.memory_space<vmem>>, vector<1x128x128xf32>
    %48 = vector.shape_cast %47 : vector<1x128x128xf32> to vector<128x128xf32>
    %cst_37 = arith.constant dense<0.000000e+00> : vector<32x128xf32>
    %49 = tpu.matmul %43, %48, %cst_37 {dimension_numbers = #tpu.dot_dimension_numbers<[1], [0], [0], [1], [0, 0, 1, 1], [], []>} : vector<32x128xf32>, vector<128x128xf32>, vector<32x128xf32> -> vector<32x128xf32>
    %c2_38 = arith.constant 2 : index
    %c0_39 = arith.constant 0 : index
    %c0_40 = arith.constant 0 : index
    %50 = vector.load %arg4[%c2_38, %c0_39, %c0_40] : memref<3x128x128xf32, #tpu.memory_space<vmem>>, vector<1x128x128xf32>
    %51 = vector.shape_cast %50 : vector<1x128x128xf32> to vector<128x128xf32>
    %cst_41 = arith.constant dense<0.000000e+00> : vector<32x128xf32>
    %52 = tpu.matmul %43, %51, %cst_41 {dimension_numbers = #tpu.dot_dimension_numbers<[1], [0], [0], [1], [0, 0, 1, 1], [], []>} : vector<32x128xf32>, vector<128x128xf32>, vector<32x128xf32> -> vector<32x128xf32>
    %cst_42 = arith.constant dense<0.000000e+00> : vector<32x128xf32>
    %53 = tpu.matmul %0, %46, %cst_42 {dimension_numbers = #tpu.dot_dimension_numbers<[1], [0], [0], [1], [0, 0, 1, 1], [], []>} : vector<32x32xf32>, vector<32x128xf32>, vector<32x128xf32> -> vector<32x128xf32>
    %54 = arith.addf %53, %49 : vector<32x128xf32>
    %cst_43 = arith.constant dense<0.000000e+00> : vector<32x128xf32>
    %55 = tpu.matmul %1, %52, %cst_43 {dimension_numbers = #tpu.dot_dimension_numbers<[1], [0], [0], [1], [0, 0, 1, 1], [], []>} : vector<32x32xf32>, vector<32x128xf32>, vector<32x128xf32> -> vector<32x128xf32>
    %56 = arith.addf %54, %55 : vector<32x128xf32>
    %cst_44 = arith.constant dense<0.000000e+00> : vector<32x128xf32>
    %57 = tpu.matmul %56, %2, %cst_44 {dimension_numbers = #tpu.dot_dimension_numbers<[1], [0], [0], [1], [0, 0, 1, 1], [], []>} : vector<32x128xf32>, vector<128x128xf32>, vector<32x128xf32> -> vector<32x128xf32>
    %cst_45 = arith.constant dense<0.000000e+00> : vector<128xf32>
    %58 = vector.multi_reduction <add>, %57, %cst_45 [0] : vector<32x128xf32> to vector<128xf32>
    %59 = vector.shape_cast %58 : vector<128xf32> to vector<1x128xf32>
    %cst_46 = arith.constant 0.001953125 : f32
    %60 = vector.broadcast %cst_46 : f32 to vector<1x128xf32>
    %61 = arith.mulf %59, %60 : vector<1x128xf32>
    %62 = arith.mulf %56, %56 : vector<32x128xf32>
    %cst_47 = arith.constant dense<0.000000e+00> : vector<32x128xf32>
    %63 = tpu.matmul %62, %2, %cst_47 {dimension_numbers = #tpu.dot_dimension_numbers<[1], [0], [0], [1], [0, 0, 1, 1], [], []>} : vector<32x128xf32>, vector<128x128xf32>, vector<32x128xf32> -> vector<32x128xf32>
    %cst_48 = arith.constant dense<0.000000e+00> : vector<128xf32>
    %64 = vector.multi_reduction <add>, %63, %cst_48 [0] : vector<32x128xf32> to vector<128xf32>
    %65 = vector.shape_cast %64 : vector<128xf32> to vector<1x128xf32>
    %cst_49 = arith.constant 0.001953125 : f32
    %66 = vector.broadcast %cst_49 : f32 to vector<1x128xf32>
    %67 = arith.mulf %65, %66 : vector<1x128xf32>
    %68 = arith.mulf %61, %61 : vector<1x128xf32>
    %69 = arith.subf %67, %68 : vector<1x128xf32>
    %c0_50 = arith.constant 0 : index
    %c0_51 = arith.constant 0 : index
    %70 = vector.load %arg8[%c0_50, %c0_51] : memref<1x128xf32, #tpu.memory_space<vmem>>, vector<1x128xf32>
    %cst_52 = arith.constant 9.99999974E-6 : f32
    %71 = vector.broadcast %cst_52 : f32 to vector<1x128xf32>
    %72 = arith.addf %69, %71 : vector<1x128xf32>
    %73 = math.rsqrt %72 : vector<1x128xf32>
    %74 = arith.mulf %70, %73 : vector<1x128xf32>
    %c0_53 = arith.constant 0 : index
    %c0_54 = arith.constant 0 : index
    %75 = vector.load %arg9[%c0_53, %c0_54] : memref<1x128xf32, #tpu.memory_space<vmem>>, vector<1x128xf32>
    %76 = arith.mulf %61, %74 : vector<1x128xf32>
    %77 = arith.subf %75, %76 : vector<1x128xf32>
    %78 = vector.broadcast %74 : vector<1x128xf32> to vector<32x128xf32>
    %79 = arith.mulf %56, %78 : vector<32x128xf32>
    %80 = vector.broadcast %77 : vector<1x128xf32> to vector<32x128xf32>
    %81 = arith.addf %79, %80 : vector<32x128xf32>
    %cst_55 = arith.constant 0.000000e+00 : f32
    %82 = vector.broadcast %cst_55 : f32 to vector<32x128xf32>
    %83 = arith.maximumf %81, %82 : vector<32x128xf32>
    %c0_56 = arith.constant 0 : index
    %c0_57 = arith.constant 0 : index
    %84 = vector.load %arg10[%c0_56, %c0_57] : memref<32x128xf32, #tpu.memory_space<vmem>>, vector<32x128xf32>
    tpu.vector_store %arg10[%c0_56, %c0_57], %83 {strides = array<i32>} : memref<32x128xf32, #tpu.memory_space<vmem>>, vector<32x128xf32>,
    return
  }
}

</mosaic_0001>

<llo_original>
// kernel: tile.23
$region0: #{tile.23}
  #allocation0 [shape = 's32[1]{0}', space=sflag, size = 0x4, scoped, tag = 'scoped memory for tile.23']
  %s0 = inlined_call_operand.vmem [shape: f32[8], index: 0, kind: input, shape index: {}]
  %s1 = inlined_call_operand.vmem [shape: f32[16,8], index: 1, kind: output, shape index: {}]
  // Predicated region
  $region2: #{tile.23} parent=0 // pred_check
    _
  $region3: #{tile.23} parent=0 // pred_check_branch
    %3 = sbr.rel (0) target = $region5
  $region4: #{tile.23} parent=0 // pred_region
    _
  $region5: #{tile.23} parent=0 // pred_fallthru
    _
  %v4 = vld [vmem:[%s0] ss:$0 sm:$0xff]
  %5 = vst [vmem:[%s1] sm:$0xff] %v4
  %s6 = scalar_lea.vmem %s1, 8
  %7 = vst [vmem:[%s6] sm:$0xff] %v4

// kernel: tile.24
$region0: #{tile.24}
  %s0 = inlined_call_operand.vmem [shape: f32[16,8], index: 0, kind: input, shape index: {}]
  %s1 = inlined_call_operand.vmem [shape: f32[1,128], index: 1, kind: output, shape index: {}]
  $region1: #{tile.24} parent=0
    #allocation0 [shape = 'u8[4096]{0}', space=vmem, size = 0x1000, scoped, tag = 'scoped mem for output reshape']
    %v2 = vld [vmem:[%s0] sm:$0x1]
    %vm3 = vcmask 64512
    %4 = vst.msk [vmem:[#allocation0] sm:$0x1] %vm3, %v2
    %s5 = scalar_lea.vmem %s0, 15
    %v6 = vld [vmem:[%s5] sm:$0x1]
    %7 = vrot.lane.b32.xlu0 %v6, 120
    %v8 = vpop.permute.xlu0 %7
    %vm9 = vcmask 1048512
    %10 = vst.msk [vmem:[#allocation0] sm:$0x1] %vm9, %v8
    %s11 = scalar_lea.vmem %s0, 14
    %v12 = vld [vmem:[%s11] sm:$0x1]
    %13 = vrot.lane.b32.xlu0 %v12, 112
    %v14 = vpop.permute.xlu0 %13
    %vm15 = vcmask 982912
    %16 = vst.msk [vmem:[#allocation0] sm:$0x1] %vm15, %v14
    %s17 = scalar_lea.vmem %s0, 13
    %v18 = vld [vmem:[%s17] sm:$0x1]
    %19 = vrot.lane.b32.xlu0 %v18, 104
    %v20 = vpop.permute.xlu0 %19
    %vm21 = vcmask 917312
    %22 = vst.msk [vmem:[#allocation0] sm:$0x1] %vm21, %v20
    %s23 = scalar_lea.vmem %s0, 12
    %v24 = vld [vmem:[%s23] sm:$0x1]
    %25 = vrot.lane.b32.xlu0 %v24, 96
    %v26 = vpop.permute.xlu0 %25
    %vm27 = vcmask 851712
    %28 = vst.msk [vmem:[#allocation0] sm:$0x1] %vm27, %v26
    %s29 = scalar_lea.vmem %s0, 11
    %v30 = vld [vmem:[%s29] sm:$0x1]
    %31 = vrot.lane.b32.xlu0 %v30, 88
    %v32 = vpop.permute.xlu0 %31
    %vm33 = vcmask 786112
    %34 = vst.msk [vmem:[#allocation0] sm:$0x1] %vm33, %v32
    %s35 = scalar_lea.vmem %s0, 10
    %v36 = vld [vmem:[%s35] sm:$0x1]
    %37 = vrot.lane.b32.xlu0 %v36, 80
    %v38 = vpop.permute.xlu0 %37
    %vm39 = vcmask 720512
    %40 = vst.msk [vmem:[#allocation0] sm:$0x1] %vm39, %v38
    %s41 = scalar_lea.vmem %s0, 9
    %v42 = vld [vmem:[%s41] sm:$0x1]
    %43 = vrot.lane.b32.xlu0 %v42, 72
    %v44 = vpop.permute.xlu0 %43
    %vm45 = vcmask 654912
    %46 = vst.msk [vmem:[#allocation0] sm:$0x1] %vm45, %v44
    %s47 = scalar_lea.vmem %s0, 8
    %v48 = vld [vmem:[%s47] sm:$0x1]
    %49 = vrot.lane.b32.xlu0 %v48, 64
    %v50 = vpop.permute.xlu0 %49
    %vm51 = vcmask 589312
    %52 = vst.msk [vmem:[#allocation0] sm:$0x1] %vm51, %v50
    %s53 = scalar_lea.vmem %s0, 7
    %v54 = vld [vmem:[%s53] sm:$0x1]
    %55 = vrot.lane.b32.xlu0 %v54, 56
    %v56 = vpop.permute.xlu0 %55
    %vm57 = vcmask 523712
    %58 = vst.msk [vmem:[#allocation0] sm:$0x1] %vm57, %v56
    %s59 = scalar_lea.vmem %s0, 6
    %v60 = vld [vmem:[%s59] sm:$0x1]
    %61 = vrot.lane.b32.xlu0 %v60, 48
    %v62 = vpop.permute.xlu0 %61
    %vm63 = vcmask 458112
    %64 = vst.msk [vmem:[#allocation0] sm:$0x1] %vm63, %v62
    %s65 = scalar_lea.vmem %s0, 5
    %v66 = vld [vmem:[%s65] sm:$0x1]
    %67 = vrot.lane.b32.xlu0 %v66, 40
    %v68 = vpop.permute.xlu0 %67
    %vm69 = vcmask 392512
    %70 = vst.msk [vmem:[#allocation0] sm:$0x1] %vm69, %v68
    %s71 = scalar_lea.vmem %s0, 4
    %v72 = vld [vmem:[%s71] sm:$0x1]
    %73 = vrot.lane.b32.xlu0 %v72, 32
    %v74 = vpop.permute.xlu0 %73
    %vm75 = vcmask 326912
    %76 = vst.msk [vmem:[#allocation0] sm:$0x1] %vm75, %v74
    %s77 = scalar_lea.vmem %s0, 3
    %v78 = vld [vmem:[%s77] sm:$0x1]
    %79 = vrot.lane.b32.xlu0 %v78, 24
    %v80 = vpop.permute.xlu0 %79
    %vm81 = vcmask 261312
    %82 = vst.msk [vmem:[#allocation0] sm:$0x1] %vm81, %v80
    %s83 = scalar_lea.vmem %s0, 2
    %v84 = vld [vmem:[%s83] sm:$0x1]
    %85 = vrot.lane.b32.xlu0 %v84, 16
    %v86 = vpop.permute.xlu0 %85
    %vm87 = vcmask 195712
    %88 = vst.msk [vmem:[#allocation0] sm:$0x1] %vm87, %v86
    %s89 = scalar_lea.vmem %s0, 1
    %v90 = vld [vmem:[%s89] sm:$0x1]
    %91 = vrot.lane.b32.xlu0 %v90, 8
    %v92 = vpop.permute.xlu0 %91
    %vm93 = vcmask 130112
    %94 = vst.msk [vmem:[#allocation0] sm:$0x1] %vm93, %v92
    %s96 = sshllo.u32 0, 1
    %v98 = vld [vmem:[#allocation0] sm:%s96]
    %s99 = sshllo.u32 0, 1
    %100 = vst [vmem:[%s1] sm:%s99] %v98

// kernel: double_conv.1
$region0: #{double_conv.1}
  #allocation0 [shape = 'u32[]', space=smem, size = 0x4, offset = 0x4, fixed_abs, tag = 'smem constant byte address 0x4 - core index']
  #allocation1 [shape = 'u32[144,128]{1,0:T(1,128)}', space=vmem, size = 0x12000, scoped, tag = 'internal scratch']
  %s0 = inlined_call_operand.vmem [shape: f32[32,64], index: 0, kind: input, shape index: {}]
  %s1 = inlined_call_operand.vmem [shape: f32[32,32], index: 1, kind: input, shape index: {}]
  %s2 = inlined_call_operand.vmem [shape: f32[32,32], index: 2, kind: input, shape index: {}]
  %s3 = inlined_call_operand.vmem [shape: f32[3,64,128], index: 3, kind: input, shape index: {}]
  %s4 = inlined_call_operand.vmem [shape: f32[3,128,128], index: 4, kind: input, shape index: {}]
  %s5 = inlined_call_operand.vmem [shape: f32[128,128], index: 5, kind: input, shape index: {}]
  %s6 = inlined_call_operand.vmem [shape: f32[1,128], index: 6, kind: input, shape index: {}]
  %s7 = inlined_call_operand.vmem [shape: f32[1,128], index: 7, kind: input, shape index: {}]
  %s8 = inlined_call_operand.vmem [shape: f32[1,128], index: 8, kind: input, shape index: {}]
  %s9 = inlined_call_operand.vmem [shape: f32[1,128], index: 9, kind: input, shape index: {}]
  %s10 = inlined_call_operand.vmem [shape: f32[32,128], index: 10, kind: output, shape index: {}]
  %s11 = sld [smem:[#allocation0]]
  $region50: #{double_conv.1} parent=0
    _
  %s13 = ssub.s32 1, %s11
  %s14 = scalar_select 0, %s13, %s11
  // Predicated region
  $region2: #{double_conv.1} parent=0 // pred_check
    _
  $region3: #{double_conv.1} parent=0 // pred_check_branch
    %16 = sbr.rel (0) target = $region5
  $region4: #{double_conv.1} parent=0 // pred_region
    _
  $region5: #{double_conv.1} parent=0 // pred_fallthru
    _
  // Predicated region
  $region6: #{double_conv.1} parent=0 // pred_check
    _
  $region7: #{double_conv.1} parent=0 // pred_check_branch
    %18 = sbr.rel (0) target = $region9
  $region8: #{double_conv.1} parent=0 // pred_region
    _
  $region9: #{double_conv.1} parent=0 // pred_fallthru
    _
  // Predicated region
  $region10: #{double_conv.1} parent=0 // pred_check
    _
  $region11: #{double_conv.1} parent=0 // pred_check_branch
    %20 = sbr.rel (0) target = $region13
  $region12: #{double_conv.1} parent=0 // pred_region
    _
  $region13: #{double_conv.1} parent=0 // pred_fallthru
    _
  // Predicated region
  $region14: #{double_conv.1} parent=0 // pred_check
    _
  $region15: #{double_conv.1} parent=0 // pred_check_branch
    %22 = sbr.rel (0) target = $region17
  $region16: #{double_conv.1} parent=0 // pred_region
    _
  $region17: #{double_conv.1} parent=0 // pred_fallthru
    _
  // Predicated region
  $region18: #{double_conv.1} parent=0 // pred_check
    _
  $region19: #{double_conv.1} parent=0 // pred_check_branch
    %24 = sbr.rel (0) target = $region21
  $region20: #{double_conv.1} parent=0 // pred_region
    _
  $region21: #{double_conv.1} parent=0 // pred_fallthru
    _
  // Predicated region
  $region22: #{double_conv.1} parent=0 // pred_check
    _
  $region23: #{double_conv.1} parent=0 // pred_check_branch
    %26 = sbr.rel (0) target = $region25
  $region24: #{double_conv.1} parent=0 // pred_region
    _
  $region25: #{double_conv.1} parent=0 // pred_fallthru
    _
  // Predicated region
  $region26: #{double_conv.1} parent=0 // pred_check
    _
  $region27: #{double_conv.1} parent=0 // pred_check_branch
    %28 = sbr.rel (0) target = $region29
  $region28: #{double_conv.1} parent=0 // pred_region
    _
  $region29: #{double_conv.1} parent=0 // pred_fallthru
    _
  // Predicated region
  $region30: #{double_conv.1} parent=0 // pred_check
    _
  $region31: #{double_conv.1} parent=0 // pred_check_branch
    %30 = sbr.rel (0) target = $region33
  $region32: #{double_conv.1} parent=0 // pred_region
    _
  $region33: #{double_conv.1} parent=0 // pred_fallthru
    _
  // Predicated region
  $region34: #{double_conv.1} parent=0 // pred_check
    _
  $region35: #{double_conv.1} parent=0 // pred_check_branch
    %32 = sbr.rel (0) target = $region37
  $region36: #{double_conv.1} parent=0 // pred_region
    _
  $region37: #{double_conv.1} parent=0 // pred_fallthru
    _
  // Predicated region
  $region38: #{double_conv.1} parent=0 // pred_check
    _
  $region39: #{double_conv.1} parent=0 // pred_check_branch
    %34 = sbr.rel (0) target = $region41
  $region40: #{double_conv.1} parent=0 // pred_region
    _
  $region41: #{double_conv.1} parent=0 // pred_fallthru
    _
  %v35 = vld [vmem:[%s1] sm:$0xff]
  %v36 = vld [vmem:[%s1 + $0x8] sm:$0xff]
  %v37 = vld [vmem:[%s1 + $0x10] sm:$0xff]
  %v38 = vld [vmem:[%s1 + $0x18] sm:$0xff]
  %v39 = vld [vmem:[%s2] sm:$0xff]
  %v40 = vld [vmem:[%s2 + $0x8] sm:$0xff]
  %v41 = vld [vmem:[%s2 + $0x10] sm:$0xff]
  %v42 = vld [vmem:[%s2 + $0x18] sm:$0xff]
  %v43 = vld [vmem:[%s5] sm:$0xff]
  %v44 = vld [vmem:[%s5 + $0x8] sm:$0xff]
  %v45 = vld [vmem:[%s5 + $0x10] sm:$0xff]
  %v46 = vld [vmem:[%s5 + $0x18] sm:$0xff]
  %v47 = vld [vmem:[%s5 + $0x20] sm:$0xff]
  %v48 = vld [vmem:[%s5 + $0x28] sm:$0xff]
  %v49 = vld [vmem:[%s5 + $0x30] sm:$0xff]
  %v50 = vld [vmem:[%s5 + $0x38] sm:$0xff]
  %v51 = vld [vmem:[%s5 + $0x40] sm:$0xff]
  %v52 = vld [vmem:[%s5 + $0x48] sm:$0xff]
  %v53 = vld [vmem:[%s5 + $0x50] sm:$0xff]
  %v54 = vld [vmem:[%s5 + $0x58] sm:$0xff]
  %v55 = vld [vmem:[%s5 + $0x60] sm:$0xff]
  %v56 = vld [vmem:[%s5 + $0x68] sm:$0xff]
  %v57 = vld [vmem:[%s5 + $0x70] sm:$0xff]
  %v58 = vld [vmem:[%s5 + $0x78] sm:$0xff]
  %v59 = vld [vmem:[%s0] sm:$0xff]
  %v60 = vld [vmem:[%s0 + $0x8] sm:$0xff]
  %v61 = vld [vmem:[%s0 + $0x10] sm:$0xff]
  %v62 = vld [vmem:[%s0 + $0x18] sm:$0xff]
  %v63 = vld [vmem:[%s3] sm:$0xff]
  %v64 = vld [vmem:[%s3 + $0x8] sm:$0xff]
  %v65 = vld [vmem:[%s3 + $0x10] sm:$0xff]
  %v66 = vld [vmem:[%s3 + $0x18] sm:$0xff]
  %v67 = vld [vmem:[%s3 + $0x20] sm:$0xff]
  %v68 = vld [vmem:[%s3 + $0x28] sm:$0xff]
  %v69 = vld [vmem:[%s3 + $0x30] sm:$0xff]
  %v70 = vld [vmem:[%s3 + $0x38] sm:$0xff]
  %vm71 = vcmask 523264
  %v73 = vsel %vm71, %v59, 0
  %v76 = vsel %vm71, %v60, 0
  %v79 = vsel %vm71, %v61, 0
  %v82 = vsel %vm71, %v62, 0
  %84 = vmatprep.subr.mxu0 0.0
  %85 = vmatpush1.msra.mxu0 %v63
  %86 = vmatprep.subr.mxu0 0.0
  %87 = vmatpush1.msra.mxu0 %v64
  %88 = vmatprep.subr.mxu0 0.0
  %89 = vmatpush1.msra.mxu0 %v65
  %90 = vmatprep.subr.mxu0 0.0
  %91 = vmatpush1.msra.mxu0 %v66
  %92 = vmatprep.subr.mxu0 0.0
  %93 = vmatpush1.msra.mxu0 %v67
  %94 = vmatprep.subr.mxu0 0.0
  %95 = vmatpush1.msra.mxu0 %v68
  %96 = vmatprep.subr.mxu0 0.0
  %97 = vmatpush1.msra.mxu0 %v69
  %98 = vmatprep.subr.mxu0 0.0
  %99 = vmatpush1.msra.mxu0 %v70
  %100 = vmatprep.subr.mxu0 0.0
  %101 = vmatpush1.msra.mxu0 0.0
  %102 = vmatprep.subr.mxu0 0.0
  %103 = vmatpush1.msra.mxu0 0.0
  %104 = vmatprep.subr.mxu0 0.0
  %105 = vmatpush1.msra.mxu0 0.0
  %106 = vmatprep.subr.mxu0 0.0
  %107 = vmatpush1.msra.mxu0 0.0
  %108 = vmatprep.subr.mxu0 0.0
  %109 = vmatpush1.msra.mxu0 0.0
  %110 = vmatprep.subr.mxu0 0.0
  %111 = vmatpush1.msra.mxu0 0.0
  %112 = vmatprep.subr.mxu0 0.0
  %113 = vmatpush1.msra.mxu0 0.0
  %114 = vmatprep.subr.mxu0 0.0
  %115 = vmatpush1.msra.mxu0 0.0
  %116 = vmatprep.subr.mxu0 0.0
  %117 = vmatpush1.msra.mxu0 0.0
  %118 = vmatprep.subr.mxu0 0.0
  %119 = vmatpush1.msra.mxu0 0.0
  %120 = vmatprep.subr.mxu0 0.0
  %121 = vmatpush1.msra.mxu0 0.0
  %122 = vmatprep.subr.mxu0 0.0
  %123 = vmatpush1.msra.mxu0 0.0
  %124 = vmatprep.subr.mxu0 0.0
  %125 = vmatpush1.msra.mxu0 0.0
  %126 = vmatprep.subr.mxu0 0.0
  %127 = vmatpush1.msra.mxu0 0.0
  %128 = vmatprep.subr.mxu0 0.0
  %129 = vmatpush1.msra.mxu0 0.0
  %130 = vmatprep.subr.mxu0 0.0
  %131 = vmatpush1.msra.mxu0 0.0
  %132 = vmatprep.subr.mxu0 0.0
  %133 = vmatpush1.msra.mxu0 0.0
  %134 = vmatprep.subr.mxu0 0.0
  %135 = vmatpush1.msra.mxu0 0.0
  %136 = vmatprep.subr.mxu0 0.0
  %137 = vmatpush1.msra.mxu0 0.0
  %138 = vmatprep.subr.mxu0 0.0
  %139 = vmatpush1.msra.mxu0 0.0
  %140 = vmatprep.subr.mxu0 0.0
  %141 = vmatpush1.msra.mxu0 0.0
  %142 = vmatprep.subr.mxu0 0.0
  %143 = vmatpush1.msra.mxu0 0.0
  %144 = vmatprep.subr.mxu0 0.0
  %145 = vmatpush1.msra.mxu0 0.0
  %146 = vmatprep.subr.mxu0 0.0
  %147 = vmatpush1.msra.mxu0 0.0
  %148 = vmatprep.mubr.f32.mxu0 0.0
  %149 = vmatmul.mubr.f32.gmra.mrb[0].mxu0 %v73
  %v150 = vpop.f32.mrb[0].mxu0
  %v151 = vadd.f32 0.0, %v150
  %v152 = vpop.f32.mrb[0].mxu0
  %153 = vmatprep.mubr.f32.mxu0 0.0
  %154 = vmatmul.mubr.f32.gmra.mrb[0].mxu0 %v76
  %v155 = vpop.f32.mrb[0].mxu0
  %v156 = vadd.f32 0.0, %v155
  %v157 = vpop.f32.mrb[0].mxu0
  %158 = vmatprep.mubr.f32.mxu0 0.0
  %159 = vmatmul.mubr.f32.gmra.mrb[0].mxu0 %v79
  %v160 = vpop.f32.mrb[0].mxu0
  %v161 = vadd.f32 0.0, %v160
  %v162 = vpop.f32.mrb[0].mxu0
  %163 = vmatprep.mubr.f32.mxu0 0.0
  %164 = vmatmul.mubr.f32.gmra.mrb[0].mxu0 %v82
  %v165 = vpop.f32.mrb[0].mxu0
  %v166 = vadd.f32 0.0, %v165
  %v167 = vpop.f32.mrb[0].mxu0
  %168 = vdwg.mxu0
  %s169 = scalar_lea.vmem %s3, 64
  %v170 = vld [vmem:[%s169] sm:$0xff]
  %v171 = vld [vmem:[%s169 + $0x8] sm:$0xff]
  %v172 = vld [vmem:[%s169 + $0x10] sm:$0xff]
  %v173 = vld [vmem:[%s169 + $0x18] sm:$0xff]
  %v174 = vld [vmem:[%s169 + $0x20] sm:$0xff]
  %v175 = vld [vmem:[%s169 + $0x28] sm:$0xff]
  %v176 = vld [vmem:[%s169 + $0x30] sm:$0xff]
  %v177 = vld [vmem:[%s169 + $0x38] sm:$0xff]
  %178 = vmatprep.subr.mxu0 0.0
  %179 = vmatpush1.msra.mxu0 %v170
  %180 = vmatprep.subr.mxu0 0.0
  %181 = vmatpush1.msra.mxu0 %v171
  %182 = vmatprep.subr.mxu0 0.0
  %183 = vmatpush1.msra.mxu0 %v172
  %184 = vmatprep.subr.mxu0 0.0
  %185 = vmatpush1.msra.mxu0 %v173
  %186 = vmatprep.subr.mxu0 0.0
  %187 = vmatpush1.msra.mxu0 %v174
  %188 = vmatprep.subr.mxu0 0.0
  %189 = vmatpush1.msra.mxu0 %v175
  %190 = vmatprep.subr.mxu0 0.0
  %191 = vmatpush1.msra.mxu0 %v176
  %192 = vmatprep.subr.mxu0 0.0
  %193 = vmatpush1.msra.mxu0 %v177
  %194 = vmatprep.subr.mxu0 0.0
  %195 = vmatpush1.msra.mxu0 0.0
  %196 = vmatprep.subr.mxu0 0.0
  %197 = vmatpush1.msra.mxu0 0.0
  %198 = vmatprep.subr.mxu0 0.0
  %199 = vmatpush1.msra.mxu0 0.0
  %200 = vmatprep.subr.mxu0 0.0
  %201 = vmatpush1.msra.mxu0 0.0
  %202 = vmatprep.subr.mxu0 0.0
  %203 = vmatpush1.msra.mxu0 0.0
  %204 = vmatprep.subr.mxu0 0.0
  %205 = vmatpush1.msra.mxu0 0.0
  %206 = vmatprep.subr.mxu0 0.0
  %207 = vmatpush1.msra.mxu0 0.0
  %208 = vmatprep.subr.mxu0 0.0
  %209 = vmatpush1.msra.mxu0 0.0
  %210 = vmatprep.subr.mxu0 0.0
  %211 = vmatpush1.msra.mxu0 0.0
  %212 = vmatprep.subr.mxu0 0.0
  %213 = vmatpush1.msra.mxu0 0.0
  %214 = vmatprep.subr.mxu0 0.0
  %215 = vmatpush1.msra.mxu0 0.0
  %216 = vmatprep.subr.mxu0 0.0
  %217 = vmatpush1.msra.mxu0 0.0
  %218 = vmatprep.subr.mxu0 0.0
  %219 = vmatpush1.msra.mxu0 0.0
  %220 = vmatprep.subr.mxu0 0.0
  %221 = vmatpush1.msra.mxu0 0.0
  %222 = vmatprep.subr.mxu0 0.0
  %223 = vmatpush1.msra.mxu0 0.0
  %224 = vmatprep.subr.mxu0 0.0
  %225 = vmatpush1.msra.mxu0 0.0
  %226 = vmatprep.subr.mxu0 0.0
  %227 = vmatpush1.msra.mxu0 0.0
  %228 = vmatprep.subr.mxu0 0.0
  %229 = vmatpush1.msra.mxu0 0.0
  %230 = vmatprep.subr.mxu0 0.0
  %231 = vmatpush1.msra.mxu0 0.0
  %232 = vmatprep.subr.mxu0 0.0
  %233 = vmatpush1.msra.mxu0 0.0
  %234 = vmatprep.subr.mxu0 0.0
  %235 = vmatpush1.msra.mxu0 0.0
  %236 = vmatprep.subr.mxu0 0.0
  %237 = vmatpush1.msra.mxu0 0.0
  %238 = vmatprep.subr.mxu0 0.0
  %239 = vmatpush1.msra.mxu0 0.0
  %240 = vmatprep.subr.mxu0 0.0
  %241 = vmatpush1.msra.mxu0 0.0
  %242 = vmatprep.mubr.f32.mxu0 0.0
  %243 = vmatmul.mubr.f32.gmra.mrb[0].mxu0 %v73
  %v244 = vpop.f32.mrb[0].mxu0
  %v245 = vadd.f32 0.0, %v244
  %v246 = vpop.f32.mrb[0].mxu0
  %247 = vmatprep.mubr.f32.mxu0 0.0
  %248 = vmatmul.mubr.f32.gmra.mrb[0].mxu0 %v76
  %v249 = vpop.f32.mrb[0].mxu0
  %v250 = vadd.f32 0.0, %v249
  %v251 = vpop.f32.mrb[0].mxu0
  %252 = vmatprep.mubr.f32.mxu0 0.0
  %253 = vmatmul.mubr.f32.gmra.mrb[0].mxu0 %v79
  %v254 = vpop.f32.mrb[0].mxu0
  %v255 = vadd.f32 0.0, %v254
  %v256 = vpop.f32.mrb[0].mxu0
  %257 = vmatprep.mubr.f32.mxu0 0.0
  %258 = vmatmul.mubr.f32.gmra.mrb[0].mxu0 %v82
  %v259 = vpop.f32.mrb[0].mxu0
  %v260 = vadd.f32 0.0, %v259
  %v261 = vpop.f32.mrb[0].mxu0
  %262 = vdwg.mxu0
  %s263 = scalar_lea.vmem %s3, 128
  %v264 = vld [vmem:[%s263] sm:$0xff]
  %v265 = vld [vmem:[%s263 + $0x8] sm:$0xff]
  %v266 = vld [vmem:[%s263 + $0x10] sm:$0xff]
  %v267 = vld [vmem:[%s263 + $0x18] sm:$0xff]
  %v268 = vld [vmem:[%s263 + $0x20] sm:$0xff]
  %v269 = vld [vmem:[%s263 + $0x28] sm:$0xff]
  %v270 = vld [vmem:[%s263 + $0x30] sm:$0xff]
  %v271 = vld [vmem:[%s263 + $0x38] sm:$0xff]
  %272 = vmatprep.subr.mxu0 0.0
  %273 = vmatpush1.msra.mxu0 %v264
  %274 = vmatprep.subr.mxu0 0.0
  %275 = vmatpush1.msra.mxu0 %v265
  %276 = vmatprep.subr.mxu0 0.0
  %277 = vmatpush1.msra.mxu0 %v266
  %278 = vmatprep.subr.mxu0 0.0
  %279 = vmatpush1.msra.mxu0 %v267
  %280 = vmatprep.subr.mxu0 0.0
  %281 = vmatpush1.msra.mxu0 %v268
  %282 = vmatprep.subr.mxu0 0.0
  %283 = vmatpush1.msra.mxu0 %v269
  %284 = vmatprep.subr.mxu0 0.0
  %285 = vmatpush1.msra.mxu0 %v270
  %286 = vmatprep.subr.mxu0 0.0
  %287 = vmatpush1.msra.mxu0 %v271
  %288 = vmatprep.subr.mxu0 0.0
  %289 = vmatpush1.msra.mxu0 0.0
  %290 = vmatprep.subr.mxu0 0.0
  %291 = vmatpush1.msra.mxu0 0.0
  %292 = vmatprep.subr.mxu0 0.0
  %293 = vmatpush1.msra.mxu0 0.0
  %294 = vmatprep.subr.mxu0 0.0
  %295 = vmatpush1.msra.mxu0 0.0
  %296 = vmatprep.subr.mxu0 0.0
  %297 = vmatpush1.msra.mxu0 0.0
  %298 = vmatprep.subr.mxu0 0.0
  %299 = vmatpush1.msra.mxu0 0.0
  %300 = vmatprep.subr.mxu0 0.0
  %301 = vmatpush1.msra.mxu0 0.0
  %302 = vmatprep.subr.mxu0 0.0
  %303 = vmatpush1.msra.mxu0 0.0
  %304 = vmatprep.subr.mxu0 0.0
  %305 = vmatpush1.msra.mxu0 0.0
  %306 = vmatprep.subr.mxu0 0.0
  %307 = vmatpush1.msra.mxu0 0.0
  %308 = vmatprep.subr.mxu0 0.0
  %309 = vmatpush1.msra.mxu0 0.0
  %310 = vmatprep.subr.mxu0 0.0
  %311 = vmatpush1.msra.mxu0 0.0
  %312 = vmatprep.subr.mxu0 0.0
  %313 = vmatpush1.msra.mxu0 0.0
  %314 = vmatprep.subr.mxu0 0.0
  %315 = vmatpush1.msra.mxu0 0.0
  %316 = vmatprep.subr.mxu0 0.0
  %317 = vmatpush1.msra.mxu0 0.0
  %318 = vmatprep.subr.mxu0 0.0
  %319 = vmatpush1.msra.mxu0 0.0
  %320 = vmatprep.subr.mxu0 0.0
  %321 = vmatpush1.msra.mxu0 0.0
  %322 = vmatprep.subr.mxu0 0.0
  %323 = vmatpush1.msra.mxu0 0.0
  %324 = vmatprep.subr.mxu0 0.0
  %325 = vmatpush1.msra.mxu0 0.0
  %326 = vmatprep.subr.mxu0 0.0
  %327 = vmatpush1.msra.mxu0 0.0
  %328 = vmatprep.subr.mxu0 0.0
  %329 = vmatpush1.msra.mxu0 0.0
  %330 = vmatprep.subr.mxu0 0.0
  %331 = vmatpush1.msra.mxu0 0.0
  %332 = vmatprep.subr.mxu0 0.0
  %333 = vmatpush1.msra.mxu0 0.0
  %334 = vmatprep.subr.mxu0 0.0
  %335 = vmatpush1.msra.mxu0 0.0
  %336 = vmatprep.mubr.f32.mxu0 0.0
  %337 = vmatmul.mubr.f32.gmra.mrb[0].mxu0 %v73
  %v338 = vpop.f32.mrb[0].mxu0
  %v339 = vadd.f32 0.0, %v338
  %v340 = vpop.f32.mrb[0].mxu0
  %341 = vmatprep.mubr.f32.mxu0 0.0
  %342 = vmatmul.mubr.f32.gmra.mrb[0].mxu0 %v76
  %v343 = vpop.f32.mrb[0].mxu0
  %v344 = vadd.f32 0.0, %v343
  %v345 = vpop.f32.mrb[0].mxu0
  %346 = vmatprep.mubr.f32.mxu0 0.0
  %347 = vmatmul.mubr.f32.gmra.mrb[0].mxu0 %v79
  %v348 = vpop.f32.mrb[0].mxu0
  %v349 = vadd.f32 0.0, %v348
  %v350 = vpop.f32.mrb[0].mxu0
  %351 = vmatprep.mubr.f32.mxu0 0.0
  %352 = vmatmul.mubr.f32.gmra.mrb[0].mxu0 %v82
  %v353 = vpop.f32.mrb[0].mxu0
  %v354 = vadd.f32 0.0, %v353
  %v355 = vpop.f32.mrb[0].mxu0
  %356 = vdwg.mxu0
  %vm357 = vcmask 261120
  %v359 = vsel %vm357, %v35, 0
  %v362 = vsel %vm357, %v36, 0
  %v365 = vsel %vm357, %v37, 0
  %v368 = vsel %vm357, %v38, 0
  %370 = vmatprep.subr.mxu0 0.0
  %371 = vmatpush1.msra.mxu0 %v151
  %372 = vmatprep.subr.mxu0 0.0
  %373 = vmatpush1.msra.mxu0 %v156
  %374 = vmatprep.subr.mxu0 0.0
  %375 = vmatpush1.msra.mxu0 %v161
  %376 = vmatprep.subr.mxu0 0.0
  %377 = vmatpush1.msra.mxu0 %v166
  %378 = vmatprep.subr.mxu0 0.0
  %379 = vmatpush1.msra.mxu0 0.0
  %380 = vmatprep.subr.mxu0 0.0
  %381 = vmatpush1.msra.mxu0 0.0
  %382 = vmatprep.subr.mxu0 0.0
  %383 = vmatpush1.msra.mxu0 0.0
  %384 = vmatprep.subr.mxu0 0.0
  %385 = vmatpush1.msra.mxu0 0.0
  %386 = vmatprep.subr.mxu0 0.0
  %387 = vmatpush1.msra.mxu0 0.0
  %388 = vmatprep.subr.mxu0 0.0
  %389 = vmatpush1.msra.mxu0 0.0
  %390 = vmatprep.subr.mxu0 0.0
  %391 = vmatpush1.msra.mxu0 0.0
  %392 = vmatprep.subr.mxu0 0.0
  %393 = vmatpush1.msra.mxu0 0.0
  %394 = vmatprep.subr.mxu0 0.0
  %395 = vmatpush1.msra.mxu0 0.0
  %396 = vmatprep.subr.mxu0 0.0
  %397 = vmatpush1.msra.mxu0 0.0
  %398 = vmatprep.subr.mxu0 0.0
  %399 = vmatpush1.msra.mxu0 0.0
  %400 = vmatprep.subr.mxu0 0.0
  %401 = vmatpush1.msra.mxu0 0.0
  %402 = vmatprep.subr.mxu0 0.0
  %403 = vmatpush1.msra.mxu0 0.0
  %404 = vmatprep.subr.mxu0 0.0
  %405 = vmatpush1.msra.mxu0 0.0
  %406 = vmatprep.subr.mxu0 0.0
  %407 = vmatpush1.msra.mxu0 0.0
  %408 = vmatprep.subr.mxu0 0.0
  %409 = vmatpush1.msra.mxu0 0.0
  %410 = vmatprep.subr.mxu0 0.0
  %411 = vmatpush1.msra.mxu0 0.0
  %412 = vmatprep.subr.mxu0 0.0
  %413 = vmatpush1.msra.mxu0 0.0
  %414 = vmatprep.subr.mxu0 0.0
  %415 = vmatpush1.msra.mxu0 0.0
  %416 = vmatprep.subr.mxu0 0.0
  %417 = vmatpush1.msra.mxu0 0.0
  %418 = vmatprep.subr.mxu0 0.0
  %419 = vmatpush1.msra.mxu0 0.0
  %420 = vmatprep.subr.mxu0 0.0
  %421 = vmatpush1.msra.mxu0 0.0
  %422 = vmatprep.subr.mxu0 0.0
  %423 = vmatpush1.msra.mxu0 0.0
  %424 = vmatprep.subr.mxu0 0.0
  %425 = vmatpush1.msra.mxu0 0.0
  %426 = vmatprep.subr.mxu0 0.0
  %427 = vmatpush1.msra.mxu0 0.0
  %428 = vmatprep.subr.mxu0 0.0
  %429 = vmatpush1.msra.mxu0 0.0
  %430 = vmatprep.subr.mxu0 0.0
  %431 = vmatpush1.msra.mxu0 0.0
  %432 = vmatprep.subr.mxu0 0.0
  %433 = vmatpush1.msra.mxu0 0.0
  %434 = vmatprep.mubr.f32.mxu0 0.0
  %435 = vmatmul.mubr.f32.gmra.mrb[0].mxu0 %v359
  %v436 = vpop.f32.mrb[0].mxu0
  %v437 = vadd.f32 %v245, %v436
  %v438 = vpop.f32.mrb[0].mxu0
  %439 = vmatprep.mubr.f32.mxu0 0.0
  %440 = vmatmul.mubr.f32.gmra.mrb[0].mxu0 %v362
  %v441 = vpop.f32.mrb[0].mxu0
  %v442 = vadd.f32 %v250, %v441
  %v443 = vpop.f32.mrb[0].mxu0
  %444 = vmatprep.mubr.f32.mxu0 0.0
  %445 = vmatmul.mubr.f32.gmra.mrb[0].mxu0 %v365
  %v446 = vpop.f32.mrb[0].mxu0
  %v447 = vadd.f32 %v255, %v446
  %v448 = vpop.f32.mrb[0].mxu0
  %449 = vmatprep.mubr.f32.mxu0 0.0
  %450 = vmatmul.mubr.f32.gmra.mrb[0].mxu0 %v368
  %v451 = vpop.f32.mrb[0].mxu0
  %v452 = vadd.f32 %v260, %v451
  %v453 = vpop.f32.mrb[0].mxu0
  %454 = vdwg.mxu0
  %v456 = vsel %vm357, %v39, 0
  %v459 = vsel %vm357, %v40, 0
  %v462 = vsel %vm357, %v41, 0
  %v465 = vsel %vm357, %v42, 0
  %467 = vmatprep.subr.mxu0 0.0
  %468 = vmatpush1.msra.mxu0 %v339
  %469 = vmatprep.subr.mxu0 0.0
  %470 = vmatpush1.msra.mxu0 %v344
  %471 = vmatprep.subr.mxu0 0.0
  %472 = vmatpush1.msra.mxu0 %v349
  %473 = vmatprep.subr.mxu0 0.0
  %474 = vmatpush1.msra.mxu0 %v354
  %475 = vmatprep.subr.mxu0 0.0
  %476 = vmatpush1.msra.mxu0 0.0
  %477 = vmatprep.subr.mxu0 0.0
  %478 = vmatpush1.msra.mxu0 0.0
  %479 = vmatprep.subr.mxu0 0.0
  %480 = vmatpush1.msra.mxu0 0.0
  %481 = vmatprep.subr.mxu0 0.0
  %482 = vmatpush1.msra.mxu0 0.0
  %483 = vmatprep.subr.mxu0 0.0
  %484 = vmatpush1.msra.mxu0 0.0
  %485 = vmatprep.subr.mxu0 0.0
  %486 = vmatpush1.msra.mxu0 0.0
  %487 = vmatprep.subr.mxu0 0.0
  %488 = vmatpush1.msra.mxu0 0.0
  %489 = vmatprep.subr.mxu0 0.0
  %490 = vmatpush1.msra.mxu0 0.0
  %491 = vmatprep.subr.mxu0 0.0
  %492 = vmatpush1.msra.mxu0 0.0
  %493 = vmatprep.subr.mxu0 0.0
  %494 = vmatpush1.msra.mxu0 0.0
  %495 = vmatprep.subr.mxu0 0.0
  %496 = vmatpush1.msra.mxu0 0.0
  %497 = vmatprep.subr.mxu0 0.0
  %498 = vmatpush1.msra.mxu0 0.0
  %499 = vmatprep.subr.mxu0 0.0
  %500 = vmatpush1.msra.mxu0 0.0
  %501 = vmatprep.subr.mxu0 0.0
  %502 = vmatpush1.msra.mxu0 0.0
  %503 = vmatprep.subr.mxu0 0.0
  %504 = vmatpush1.msra.mxu0 0.0
  %505 = vmatprep.subr.mxu0 0.0
  %506 = vmatpush1.msra.mxu0 0.0
  %507 = vmatprep.subr.mxu0 0.0
  %508 = vmatpush1.msra.mxu0 0.0
  %509 = vmatprep.subr.mxu0 0.0
  %510 = vmatpush1.msra.mxu0 0.0
  %511 = vmatprep.subr.mxu0 0.0
  %512 = vmatpush1.msra.mxu0 0.0
  %513 = vmatprep.subr.mxu0 0.0
  %514 = vmatpush1.msra.mxu0 0.0
  %515 = vmatprep.subr.mxu0 0.0
  %516 = vmatpush1.msra.mxu0 0.0
  %517 = vmatprep.subr.mxu0 0.0
  %518 = vmatpush1.msra.mxu0 0.0
  %519 = vmatprep.subr.mxu0 0.0
  %520 = vmatpush1.msra.mxu0 0.0
  %521 = vmatprep.subr.mxu0 0.0
  %522 = vmatpush1.msra.mxu0 0.0
  %523 = vmatprep.subr.mxu0 0.0
  %524 = vmatpush1.msra.mxu0 0.0
  %525 = vmatprep.subr.mxu0 0.0
  %526 = vmatpush1.msra.mxu0 0.0
  %527 = vmatprep.subr.mxu0 0.0
  %528 = vmatpush1.msra.mxu0 0.0
  %529 = vmatprep.subr.mxu0 0.0
  %530 = vmatpush1.msra.mxu0 0.0
  %531 = vmatprep.mubr.f32.mxu0 0.0
  %532 = vmatmul.mubr.f32.gmra.mrb[0].mxu0 %v456
  %v533 = vpop.f32.mrb[0].mxu0
  %v534 = vadd.f32 0.0, %v533
  %v535 = vpop.f32.mrb[0].mxu0
  %536 = vmatprep.mubr.f32.mxu0 0.0
  %537 = vmatmul.mubr.f32.gmra.mrb[0].mxu0 %v459
  %v538 = vpop.f32.mrb[0].mxu0
  %v539 = vadd.f32 0.0, %v538
  %v540 = vpop.f32.mrb[0].mxu0
  %541 = vmatprep.mubr.f32.mxu0 0.0
  %542 = vmatmul.mubr.f32.gmra.mrb[0].mxu0 %v462
  %v543 = vpop.f32.mrb[0].mxu0
  %v544 = vadd.f32 0.0, %v543
  %v545 = vpop.f32.mrb[0].mxu0
  %546 = vmatprep.mubr.f32.mxu0 0.0
  %547 = vmatmul.mubr.f32.gmra.mrb[0].mxu0 %v465
  %v548 = vpop.f32.mrb[0].mxu0
  %v549 = vadd.f32 0.0, %v548
  %v550 = vpop.f32.mrb[0].mxu0
  %551 = vdwg.mxu0
  %v552 = vadd.f32 %v437, %v534
  %v553 = vadd.f32 %v442, %v539
  %v554 = vadd.f32 %v447, %v544
  %v555 = vadd.f32 %v452, %v549
  %556 = vmatprep.subr.mxu0 0.0
  %557 = vmatpush1.msra.mxu0 %v43
  %558 = vmatprep.subr.mxu0 0.0
  %559 = vmatpush1.msra.mxu0 %v44
  %560 = vmatprep.subr.mxu0 0.0
  %561 = vmatpush1.msra.mxu0 %v45
  %562 = vmatprep.subr.mxu0 0.0
  %563 = vmatpush1.msra.mxu0 %v46
  %564 = vmatprep.subr.mxu0 0.0
  %565 = vmatpush1.msra.mxu0 %v47
  %566 = vmatprep.subr.mxu0 0.0
  %567 = vmatpush1.msra.mxu0 %v48
  %568 = vmatprep.subr.mxu0 0.0
  %569 = vmatpush1.msra.mxu0 %v49
  %570 = vmatprep.subr.mxu0 0.0
  %571 = vmatpush1.msra.mxu0 %v50
  %572 = vmatprep.subr.mxu0 0.0
  %573 = vmatpush1.msra.mxu0 %v51
  %574 = vmatprep.subr.mxu0 0.0
  %575 = vmatpush1.msra.mxu0 %v52
  %576 = vmatprep.subr.mxu0 0.0
  %577 = vmatpush1.msra.mxu0 %v53
  %578 = vmatprep.subr.mxu0 0.0
  %579 = vmatpush1.msra.mxu0 %v54
  %580 = vmatprep.subr.mxu0 0.0
  %581 = vmatpush1.msra.mxu0 %v55
  %582 = vmatprep.subr.mxu0 0.0
  %583 = vmatpush1.msra.mxu0 %v56
  %584 = vmatprep.subr.mxu0 0.0
  %585 = vmatpush1.msra.mxu0 %v57
  %586 = vmatprep.subr.mxu0 0.0
  %587 = vmatpush1.msra.mxu0 %v58
  %588 = vmatprep.subr.mxu0 0.0
  %589 = vmatpush1.msra.mxu0 0.0
  %590 = vmatprep.subr.mxu0 0.0
  %591 = vmatpush1.msra.mxu0 0.0
  %592 = vmatprep.subr.mxu0 0.0
  %593 = vmatpush1.msra.mxu0 0.0
  %594 = vmatprep.subr.mxu0 0.0
  %595 = vmatpush1.msra.mxu0 0.0
  %596 = vmatprep.subr.mxu0 0.0
  %597 = vmatpush1.msra.mxu0 0.0
  %598 = vmatprep.subr.mxu0 0.0
  %599 = vmatpush1.msra.mxu0 0.0
  %600 = vmatprep.subr.mxu0 0.0
  %601 = vmatpush1.msra.mxu0 0.0
  %602 = vmatprep.subr.mxu0 0.0
  %603 = vmatpush1.msra.mxu0 0.0
  %604 = vmatprep.subr.mxu0 0.0
  %605 = vmatpush1.msra.mxu0 0.0
  %606 = vmatprep.subr.mxu0 0.0
  %607 = vmatpush1.msra.mxu0 0.0
  %608 = vmatprep.subr.mxu0 0.0
  %609 = vmatpush1.msra.mxu0 0.0
  %610 = vmatprep.subr.mxu0 0.0
  %611 = vmatpush1.msra.mxu0 0.0
  %612 = vmatprep.subr.mxu0 0.0
  %613 = vmatpush1.msra.mxu0 0.0
  %614 = vmatprep.subr.mxu0 0.0
  %615 = vmatpush1.msra.mxu0 0.0
  %616 = vmatprep.subr.mxu0 0.0
  %617 = vmatpush1.msra.mxu0 0.0
  %618 = vmatprep.subr.mxu0 0.0
  %619 = vmatpush1.msra.mxu0 0.0
  %620 = vmatprep.mubr.f32.mxu0 0.0
  %621 = vmatmul.mubr.f32.gmra.mrb[0].mxu0 %v552
  %v622 = vpop.f32.mrb[0].mxu0
  %v623 = vadd.f32 0.0, %v622
  %v624 = vpop.f32.mrb[0].mxu0
  %625 = vmatprep.mubr.f32.mxu0 0.0
  %626 = vmatmul.mubr.f32.gmra.mrb[0].mxu0 %v553
  %v627 = vpop.f32.mrb[0].mxu0
  %v628 = vadd.f32 0.0, %v627
  %v629 = vpop.f32.mrb[0].mxu0
  %630 = vmatprep.mubr.f32.mxu0 0.0
  %631 = vmatmul.mubr.f32.gmra.mrb[0].mxu0 %v554
  %v632 = vpop.f32.mrb[0].mxu0
  %v633 = vadd.f32 0.0, %v632
  %v634 = vpop.f32.mrb[0].mxu0
  %635 = vmatprep.mubr.f32.mxu0 0.0
  %636 = vmatmul.mubr.f32.gmra.mrb[0].mxu0 %v555
  %v637 = vpop.f32.mrb[0].mxu0
  %v638 = vadd.f32 0.0, %v637
  %v639 = vpop.f32.mrb[0].mxu0
  %640 = vdwg.mxu0
  %v641 = vadd.f32 %v623, %v628
  %v642 = vadd.f32 %v641, %v633
  %v643 = vadd.f32 %v642, %v638
  %v644 = vrot.slane %v643, 4
  %v645 = vadd.f32 %v643, %v644
  %v646 = vrot.slane %v645, 2
  %v647 = vadd.f32 %v645, %v646
  %v648 = vrot.slane %v647, 1
  %v649 = vadd.f32 %v647, %v648
  %v650 = vmul.f32 %v649, 0.001953125
  %v651 = vmul.f32 %v552, %v552
  %v652 = vmul.f32 %v553, %v553
  %v653 = vmul.f32 %v554, %v554
  %v654 = vmul.f32 %v555, %v555
  %655 = vmatprep.subr.mxu0 0.0
  %656 = vmatpush1.msra.mxu0 %v43
  %657 = vmatprep.subr.mxu0 0.0
  %658 = vmatpush1.msra.mxu0 %v44
  %659 = vmatprep.subr.mxu0 0.0
  %660 = vmatpush1.msra.mxu0 %v45
  %661 = vmatprep.subr.mxu0 0.0
  %662 = vmatpush1.msra.mxu0 %v46
  %663 = vmatprep.subr.mxu0 0.0
  %664 = vmatpush1.msra.mxu0 %v47
  %665 = vmatprep.subr.mxu0 0.0
  %666 = vmatpush1.msra.mxu0 %v48
  %667 = vmatprep.subr.mxu0 0.0
  %668 = vmatpush1.msra.mxu0 %v49
  %669 = vmatprep.subr.mxu0 0.0
  %670 = vmatpush1.msra.mxu0 %v50
  %671 = vmatprep.subr.mxu0 0.0
  %672 = vmatpush1.msra.mxu0 %v51
  %673 = vmatprep.subr.mxu0 0.0
  %674 = vmatpush1.msra.mxu0 %v52
  %675 = vmatprep.subr.mxu0 0.0
  %676 = vmatpush1.msra.mxu0 %v53
  %677 = vmatprep.subr.mxu0 0.0
  %678 = vmatpush1.msra.mxu0 %v54
  %679 = vmatprep.subr.mxu0 0.0
  %680 = vmatpush1.msra.mxu0 %v55
  %681 = vmatprep.subr.mxu0 0.0
  %682 = vmatpush1.msra.mxu0 %v56
  %683 = vmatprep.subr.mxu0 0.0
  %684 = vmatpush1.msra.mxu0 %v57
  %685 = vmatprep.subr.mxu0 0.0
  %686 = vmatpush1.msra.mxu0 %v58
  %687 = vmatprep.subr.mxu0 0.0
  %688 = vmatpush1.msra.mxu0 0.0
  %689 = vmatprep.subr.mxu0 0.0
  %690 = vmatpush1.msra.mxu0 0.0
  %691 = vmatprep.subr.mxu0 0.0
  %692 = vmatpush1.msra.mxu0 0.0
  %693 = vmatprep.subr.mxu0 0.0
  %694 = vmatpush1.msra.mxu0 0.0
  %695 = vmatprep.subr.mxu0 0.0
  %696 = vmatpush1.msra.mxu0 0.0
  %697 = vmatprep.subr.mxu0 0.0
  %698 = vmatpush1.msra.mxu0 0.0
  %699 = vmatprep.subr.mxu0 0.0
  %700 = vmatpush1.msra.mxu0 0.0
  %701 = vmatprep.subr.mxu0 0.0
  %702 = vmatpush1.msra.mxu0 0.0
  %703 = vmatprep.subr.mxu0 0.0
  %704 = vmatpush1.msra.mxu0 0.0
  %705 = vmatprep.subr.mxu0 0.0
  %706 = vmatpush1.msra.mxu0 0.0
  %707 = vmatprep.subr.mxu0 0.0
  %708 = vmatpush1.msra.mxu0 0.0
  %709 = vmatprep.subr.mxu0 0.0
  %710 = vmatpush1.msra.mxu0 0.0
  %711 = vmatprep.subr.mxu0 0.0
  %712 = vmatpush1.msra.mxu0 0.0
  %713 = vmatprep.subr.mxu0 0.0
  %714 = vmatpush1.msra.mxu0 0.0
  %715 = vmatprep.subr.mxu0 0.0
  %716 = vmatpush1.msra.mxu0 0.0
  %717 = vmatprep.subr.mxu0 0.0
  %718 = vmatpush1.msra.mxu0 0.0
  %719 = vmatprep.mubr.f32.mxu0 0.0
  %720 = vmatmul.mubr.f32.gmra.mrb[0].mxu0 %v651
  %v721 = vpop.f32.mrb[0].mxu0
  %v722 = vadd.f32 0.0, %v721
  %v723 = vpop.f32.mrb[0].mxu0
  %724 = vmatprep.mubr.f32.mxu0 0.0
  %725 = vmatmul.mubr.f32.gmra.mrb[0].mxu0 %v652
  %v726 = vpop.f32.mrb[0].mxu0
  %v727 = vadd.f32 0.0, %v726
  %v728 = vpop.f32.mrb[0].mxu0
  %729 = vmatprep.mubr.f32.mxu0 0.0
  %730 = vmatmul.mubr.f32.gmra.mrb[0].mxu0 %v653
  %v731 = vpop.f32.mrb[0].mxu0
  %v732 = vadd.f32 0.0, %v731
  %v733 = vpop.f32.mrb[0].mxu0
  %734 = vmatprep.mubr.f32.mxu0 0.0
  %735 = vmatmul.mubr.f32.gmra.mrb[0].mxu0 %v654
  %v736 = vpop.f32.mrb[0].mxu0
  %v737 = vadd.f32 0.0, %v736
  %v738 = vpop.f32.mrb[0].mxu0
  %739 = vdwg.mxu0
  %v740 = vadd.f32 %v722, %v727
  %v741 = vadd.f32 %v740, %v732
  %v742 = vadd.f32 %v741, %v737
  %v743 = vrot.slane %v742, 4
  %v744 = vadd.f32 %v742, %v743
  %v745 = vrot.slane %v744, 2
  %v746 = vadd.f32 %v744, %v745
  %v747 = vrot.slane %v746, 1
  %v748 = vadd.f32 %v746, %v747
  %v749 = vmul.f32 %v748, 0.001953125
  %v750 = vmul.f32 %v650, %v650
  %v751 = vsub.f32 %v749, %v750
  %v752 = vld [vmem:[%s6] sm:$0x1]
  %v753 = vadd.f32 %v751, 1e-05
  %v754 = vrsqrt.pop %v753
  %v755 = vmul.f32 %v752, %v754
  %v756 = vld [vmem:[%s7] sm:$0x1]
  %v757 = vmul.f32 %v650, %v755
  %v758 = vsub.f32 %v756, %v757
  %v760 = vlaneseq
  %v761 = vshrl.u32 %v760, 7
  %v762 = vsub.s32 0, %v761
  %v763 = vrot.slane %v755, %v762
  %v765 = vmul.f32 %v552, %v763
  %v766 = vmul.f32 %v553, %v763
  %v767 = vmul.f32 %v554, %v763
  %v768 = vmul.f32 %v555, %v763
  %v770 = vlaneseq
  %v771 = vshrl.u32 %v770, 7
  %v772 = vsub.s32 0, %v771
  %v773 = vrot.slane %v758, %v772
  %v775 = vadd.f32 %v765, %v773
  %v776 = vadd.f32 %v766, %v773
  %v777 = vadd.f32 %v767, %v773
  %v778 = vadd.f32 %v768, %v773
  %v779 = vmax.f32 %v775, 0.0
  %v780 = vmax.f32 %v776, 0.0
  %v781 = vmax.f32 %v777, 0.0
  %v782 = vmax.f32 %v778, 0.0
  %v783 = vld [vmem:[%s4] sm:$0xff]
  %v784 = vld [vmem:[%s4 + $0x8] sm:$0xff]
  %v785 = vld [vmem:[%s4 + $0x10] sm:$0xff]
  %v786 = vld [vmem:[%s4 + $0x18] sm:$0xff]
  %v787 = vld [vmem:[%s4 + $0x20] sm:$0xff]
  %v788 = vld [vmem:[%s4 + $0x28] sm:$0xff]
  %v789 = vld [vmem:[%s4 + $0x30] sm:$0xff]
  %v790 = vld [vmem:[%s4 + $0x38] sm:$0xff]
  %v791 = vld [vmem:[%s4 + $0x40] sm:$0xff]
  %v792 = vld [vmem:[%s4 + $0x48] sm:$0xff]
  %v793 = vld [vmem:[%s4 + $0x50] sm:$0xff]
  %v794 = vld [vmem:[%s4 + $0x58] sm:$0xff]
  %v795 = vld [vmem:[%s4 + $0x60] sm:$0xff]
  %v796 = vld [vmem:[%s4 + $0x68] sm:$0xff]
  %v797 = vld [vmem:[%s4 + $0x70] sm:$0xff]
  %v798 = vld [vmem:[%s4 + $0x78] sm:$0xff]
  %799 = vmatprep.subr.mxu0 0.0
  %800 = vmatpush1.msra.mxu0 %v783
  %801 = vmatprep.subr.mxu0 0.0
  %802 = vmatpush1.msra.mxu0 %v784
  %803 = vmatprep.subr.mxu0 0.0
  %804 = vmatpush1.msra.mxu0 %v785
  %805 = vmatprep.subr.mxu0 0.0
  %806 = vmatpush1.msra.mxu0 %v786
  %807 = vmatprep.subr.mxu0 0.0
  %808 = vmatpush1.msra.mxu0 %v787
  %809 = vmatprep.subr.mxu0 0.0
  %810 = vmatpush1.msra.mxu0 %v788
  %811 = vmatprep.subr.mxu0 0.0
  %812 = vmatpush1.msra.mxu0 %v789
  %813 = vmatprep.subr.mxu0 0.0
  %814 = vmatpush1.msra.mxu0 %v790
  %815 = vmatprep.subr.mxu0 0.0
  %816 = vmatpush1.msra.mxu0 %v791
  %817 = vmatprep.subr.mxu0 0.0
  %818 = vmatpush1.msra.mxu0 %v792
  %819 = vmatprep.subr.mxu0 0.0
  %820 = vmatpush1.msra.mxu0 %v793
  %821 = vmatprep.subr.mxu0 0.0
  %822 = vmatpush1.msra.mxu0 %v794
  %823 = vmatprep.subr.mxu0 0.0
  %824 = vmatpush1.msra.mxu0 %v795
  %825 = vmatprep.subr.mxu0 0.0
  %826 = vmatpush1.msra.mxu0 %v796
  %827 = vmatprep.subr.mxu0 0.0
  %828 = vmatpush1.msra.mxu0 %v797
  %829 = vmatprep.subr.mxu0 0.0
  %830 = vmatpush1.msra.mxu0 %v798
  %831 = vmatprep.subr.mxu0 0.0
  %832 = vmatpush1.msra.mxu0 0.0
  %833 = vmatprep.subr.mxu0 0.0
  %834 = vmatpush1.msra.mxu0 0.0
  %835 = vmatprep.subr.mxu0 0.0
  %836 = vmatpush1.msra.mxu0 0.0
  %837 = vmatprep.subr.mxu0 0.0
  %838 = vmatpush1.msra.mxu0 0.0
  %839 = vmatprep.subr.mxu0 0.0
  %840 = vmatpush1.msra.mxu0 0.0
  %841 = vmatprep.subr.mxu0 0.0
  %842 = vmatpush1.msra.mxu0 0.0
  %843 = vmatprep.subr.mxu0 0.0
  %844 = vmatpush1.msra.mxu0 0.0
  %845 = vmatprep.subr.mxu0 0.0
  %846 = vmatpush1.msra.mxu0 0.0
  %847 = vmatprep.subr.mxu0 0.0
  %848 = vmatpush1.msra.mxu0 0.0
  %849 = vmatprep.subr.mxu0 0.0
  %850 = vmatpush1.msra.mxu0 0.0
  %851 = vmatprep.subr.mxu0 0.0
  %852 = vmatpush1.msra.mxu0 0.0
  %853 = vmatprep.subr.mxu0 0.0
  %854 = vmatpush1.msra.mxu0 0.0
  %855 = vmatprep.subr.mxu0 0.0
  %856 = vmatpush1.msra.mxu0 0.0
  %857 = vmatprep.subr.mxu0 0.0
  %858 = vmatpush1.msra.mxu0 0.0
  %859 = vmatprep.subr.mxu0 0.0
  %860 = vmatpush1.msra.mxu0 0.0
  %861 = vmatprep.subr.mxu0 0.0
  %862 = vmatpush1.msra.mxu0 0.0
  %863 = vmatprep.mubr.f32.mxu0 0.0
  %864 = vmatmul.mubr.f32.gmra.mrb[0].mxu0 %v779
  %v865 = vpop.f32.mrb[0].mxu0
  %v866 = vadd.f32 0.0, %v865
  %v867 = vpop.f32.mrb[0].mxu0
  %868 = vmatprep.mubr.f32.mxu0 0.0
  %869 = vmatmul.mubr.f32.gmra.mrb[0].mxu0 %v780
  %v870 = vpop.f32.mrb[0].mxu0
  %v871 = vadd.f32 0.0, %v870
  %v872 = vpop.f32.mrb[0].mxu0
  %873 = vmatprep.mubr.f32.mxu0 0.0
  %874 = vmatmul.mubr.f32.gmra.mrb[0].mxu0 %v781
  %v875 = vpop.f32.mrb[0].mxu0
  %v876 = vadd.f32 0.0, %v875
  %v877 = vpop.f32.mrb[0].mxu0
  %878 = vmatprep.mubr.f32.mxu0 0.0
  %879 = vmatmul.mubr.f32.gmra.mrb[0].mxu0 %v782
  %v880 = vpop.f32.mrb[0].mxu0
  %v881 = vadd.f32 0.0, %v880
  %v882 = vpop.f32.mrb[0].mxu0
  %883 = vdwg.mxu0
  %s884 = scalar_lea.vmem %s4, 128
  %v885 = vld [vmem:[%s884] sm:$0xff]
  %v886 = vld [vmem:[%s884 + $0x8] sm:$0xff]
  %v887 = vld [vmem:[%s884 + $0x10] sm:$0xff]
  %v888 = vld [vmem:[%s884 + $0x18] sm:$0xff]
  %v889 = vld [vmem:[%s884 + $0x20] sm:$0xff]
  %v890 = vld [vmem:[%s884 + $0x28] sm:$0xff]
  %v891 = vld [vmem:[%s884 + $0x30] sm:$0xff]
  %v892 = vld [vmem:[%s884 + $0x38] sm:$0xff]
  %v893 = vld [vmem:[%s884 + $0x40] sm:$0xff]
  %v894 = vld [vmem:[%s884 + $0x48] sm:$0xff]
  %v895 = vld [vmem:[%s884 + $0x50] sm:$0xff]
  %v896 = vld [vmem:[%s884 + $0x58] sm:$0xff]
  %v897 = vld [vmem:[%s884 + $0x60] sm:$0xff]
  %v898 = vld [vmem:[%s884 + $0x68] sm:$0xff]
  %v899 = vld [vmem:[%s884 + $0x70] sm:$0xff]
  %v900 = vld [vmem:[%s884 + $0x78] sm:$0xff]
  %901 = vmatprep.subr.mxu0 0.0
  %902 = vmatpush1.msra.mxu0 %v885
  %903 = vmatprep.subr.mxu0 0.0
  %904 = vmatpush1.msra.mxu0 %v886
  %905 = vmatprep.subr.mxu0 0.0
  %906 = vmatpush1.msra.mxu0 %v887
  %907 = vmatprep.subr.mxu0 0.0
  %908 = vmatpush1.msra.mxu0 %v888
  %909 = vmatprep.subr.mxu0 0.0
  %910 = vmatpush1.msra.mxu0 %v889
  %911 = vmatprep.subr.mxu0 0.0
  %912 = vmatpush1.msra.mxu0 %v890
  %913 = vmatprep.subr.mxu0 0.0
  %914 = vmatpush1.msra.mxu0 %v891
  %915 = vmatprep.subr.mxu0 0.0
  %916 = vmatpush1.msra.mxu0 %v892
  %917 = vmatprep.subr.mxu0 0.0
  %918 = vmatpush1.msra.mxu0 %v893
  %919 = vmatprep.subr.mxu0 0.0
  %920 = vmatpush1.msra.mxu0 %v894
  %921 = vmatprep.subr.mxu0 0.0
  %922 = vmatpush1.msra.mxu0 %v895
  %923 = vmatprep.subr.mxu0 0.0
  %924 = vmatpush1.msra.mxu0 %v896
  %925 = vmatprep.subr.mxu0 0.0
  %926 = vmatpush1.msra.mxu0 %v897
  %927 = vmatprep.subr.mxu0 0.0
  %928 = vmatpush1.msra.mxu0 %v898
  %929 = vmatprep.subr.mxu0 0.0
  %930 = vmatpush1.msra.mxu0 %v899
  %931 = vmatprep.subr.mxu0 0.0
  %932 = vmatpush1.msra.mxu0 %v900
  %933 = vmatprep.subr.mxu0 0.0
  %934 = vmatpush1.msra.mxu0 0.0
  %935 = vmatprep.subr.mxu0 0.0
  %936 = vmatpush1.msra.mxu0 0.0
  %937 = vmatprep.subr.mxu0 0.0
  %938 = vmatpush1.msra.mxu0 0.0
  %939 = vmatprep.subr.mxu0 0.0
  %940 = vmatpush1.msra.mxu0 0.0
  %941 = vmatprep.subr.mxu0 0.0
  %942 = vmatpush1.msra.mxu0 0.0
  %943 = vmatprep.subr.mxu0 0.0
  %944 = vmatpush1.msra.mxu0 0.0
  %945 = vmatprep.subr.mxu0 0.0
  %946 = vmatpush1.msra.mxu0 0.0
  %947 = vmatprep.subr.mxu0 0.0
  %948 = vmatpush1.msra.mxu0 0.0
  %949 = vmatprep.subr.mxu0 0.0
  %950 = vmatpush1.msra.mxu0 0.0
  %951 = vmatprep.subr.mxu0 0.0
  %952 = vmatpush1.msra.mxu0 0.0
  %953 = vmatprep.subr.mxu0 0.0
  %954 = vmatpush1.msra.mxu0 0.0
  %955 = vmatprep.subr.mxu0 0.0
  %956 = vmatpush1.msra.mxu0 0.0
  %957 = vmatprep.subr.mxu0 0.0
  %958 = vmatpush1.msra.mxu0 0.0
  %959 = vmatprep.subr.mxu0 0.0
  %960 = vmatpush1.msra.mxu0 0.0
  %961 = vmatprep.subr.mxu0 0.0
  %962 = vmatpush1.msra.mxu0 0.0
  %963 = vmatprep.subr.mxu0 0.0
  %964 = vmatpush1.msra.mxu0 0.0
  %965 = vmatprep.mubr.f32.mxu0 0.0
  %966 = vmatmul.mubr.f32.gmra.mrb[0].mxu0 %v779
  %v967 = vpop.f32.mrb[0].mxu0
  %v968 = vadd.f32 0.0, %v967
  %v969 = vpop.f32.mrb[0].mxu0
  %970 = vmatprep.mubr.f32.mxu0 0.0
  %971 = vmatmul.mubr.f32.gmra.mrb[0].mxu0 %v780
  %v972 = vpop.f32.mrb[0].mxu0
  %v973 = vadd.f32 0.0, %v972
  %v974 = vpop.f32.mrb[0].mxu0
  %975 = vmatprep.mubr.f32.mxu0 0.0
  %976 = vmatmul.mubr.f32.gmra.mrb[0].mxu0 %v781
  %v977 = vpop.f32.mrb[0].mxu0
  %v978 = vadd.f32 0.0, %v977
  %v979 = vpop.f32.mrb[0].mxu0
  %980 = vmatprep.mubr.f32.mxu0 0.0
  %981 = vmatmul.mubr.f32.gmra.mrb[0].mxu0 %v782
  %v982 = vpop.f32.mrb[0].mxu0
  %v983 = vadd.f32 0.0, %v982
  %v984 = vpop.f32.mrb[0].mxu0
  %985 = vdwg.mxu0
  %s986 = scalar_lea.vmem %s4, 256
  %v987 = vld [vmem:[%s986] sm:$0xff]
  %v988 = vld [vmem:[%s986 + $0x8] sm:$0xff]
  %v989 = vld [vmem:[%s986 + $0x10] sm:$0xff]
  %v990 = vld [vmem:[%s986 + $0x18] sm:$0xff]
  %v991 = vld [vmem:[%s986 + $0x20] sm:$0xff]
  %v992 = vld [vmem:[%s986 + $0x28] sm:$0xff]
  %v993 = vld [vmem:[%s986 + $0x30] sm:$0xff]
  %v994 = vld [vmem:[%s986 + $0x38] sm:$0xff]
  %v995 = vld [vmem:[%s986 + $0x40] sm:$0xff]
  %v996 = vld [vmem:[%s986 + $0x48] sm:$0xff]
  %v997 = vld [vmem:[%s986 + $0x50] sm:$0xff]
  %v998 = vld [vmem:[%s986 + $0x58] sm:$0xff]
  %v999 = vld [vmem:[%s986 + $0x60] sm:$0xff]
  %v1000 = vld [vmem:[%s986 + $0x68] sm:$0xff]
  %v1001 = vld [vmem:[%s986 + $0x70] sm:$0xff]
  %v1002 = vld [vmem:[%s986 + $0x78] sm:$0xff]
  %1003 = vmatprep.subr.mxu0 0.0
  %1004 = vmatpush1.msra.mxu0 %v987
  %1005 = vmatprep.subr.mxu0 0.0
  %1006 = vmatpush1.msra.mxu0 %v988
  %1007 = vmatprep.subr.mxu0 0.0
  %1008 = vmatpush1.msra.mxu0 %v989
  %1009 = vmatprep.subr.mxu0 0.0
  %1010 = vmatpush1.msra.mxu0 %v990
  %1011 = vmatprep.subr.mxu0 0.0
  %1012 = vmatpush1.msra.mxu0 %v991
  %1013 = vmatprep.subr.mxu0 0.0
  %1014 = vmatpush1.msra.mxu0 %v992
  %1015 = vmatprep.subr.mxu0 0.0
  %1016 = vmatpush1.msra.mxu0 %v993
  %1017 = vmatprep.subr.mxu0 0.0
  %1018 = vmatpush1.msra.mxu0 %v994
  %1019 = vmatprep.subr.mxu0 0.0
  %1020 = vmatpush1.msra.mxu0 %v995
  %1021 = vmatprep.subr.mxu0 0.0
  %1022 = vmatpush1.msra.mxu0 %v996
  %1023 = vmatprep.subr.mxu0 0.0
  %1024 = vmatpush1.msra.mxu0 %v997
  %1025 = vmatprep.subr.mxu0 0.0
  %1026 = vmatpush1.msra.mxu0 %v998
  %1027 = vmatprep.subr.mxu0 0.0
  %1028 = vmatpush1.msra.mxu0 %v999
  %1029 = vmatprep.subr.mxu0 0.0
  %1030 = vmatpush1.msra.mxu0 %v1000
  %1031 = vmatprep.subr.mxu0 0.0
  %1032 = vmatpush1.msra.mxu0 %v1001
  %1033 = vmatprep.subr.mxu0 0.0
  %1034 = vmatpush1.msra.mxu0 %v1002
  %1035 = vmatprep.subr.mxu0 0.0
  %1036 = vmatpush1.msra.mxu0 0.0
  %1037 = vmatprep.subr.mxu0 0.0
  %1038 = vmatpush1.msra.mxu0 0.0
  %1039 = vmatprep.subr.mxu0 0.0
  %1040 = vmatpush1.msra.mxu0 0.0
  %1041 = vmatprep.subr.mxu0 0.0
  %1042 = vmatpush1.msra.mxu0 0.0
  %1043 = vmatprep.subr.mxu0 0.0
  %1044 = vmatpush1.msra.mxu0 0.0
  %1045 = vmatprep.subr.mxu0 0.0
  %1046 = vmatpush1.msra.mxu0 0.0
  %1047 = vmatprep.subr.mxu0 0.0
  %1048 = vmatpush1.msra.mxu0 0.0
  %1049 = vmatprep.subr.mxu0 0.0
  %1050 = vmatpush1.msra.mxu0 0.0
  %1051 = vmatprep.subr.mxu0 0.0
  %1052 = vmatpush1.msra.mxu0 0.0
  %1053 = vmatprep.subr.mxu0 0.0
  %1054 = vmatpush1.msra.mxu0 0.0
  %1055 = vmatprep.subr.mxu0 0.0
  %1056 = vmatpush1.msra.mxu0 0.0
  %1057 = vmatprep.subr.mxu0 0.0
  %1058 = vmatpush1.msra.mxu0 0.0
  %1059 = vmatprep.subr.mxu0 0.0
  %1060 = vmatpush1.msra.mxu0 0.0
  %1061 = vmatprep.subr.mxu0 0.0
  %1062 = vmatpush1.msra.mxu0 0.0
  %1063 = vmatprep.subr.mxu0 0.0
  %1064 = vmatpush1.msra.mxu0 0.0
  %1065 = vmatprep.subr.mxu0 0.0
  %1066 = vmatpush1.msra.mxu0 0.0
  %1067 = vmatprep.mubr.f32.mxu0 0.0
  %1068 = vmatmul.mubr.f32.gmra.mrb[0].mxu0 %v779
  %v1069 = vpop.f32.mrb[0].mxu0
  %v1070 = vadd.f32 0.0, %v1069
  %v1071 = vpop.f32.mrb[0].mxu0
  %1072 = vmatprep.mubr.f32.mxu0 0.0
  %1073 = vmatmul.mubr.f32.gmra.mrb[0].mxu0 %v780
  %v1074 = vpop.f32.mrb[0].mxu0
  %v1075 = vadd.f32 0.0, %v1074
  %v1076 = vpop.f32.mrb[0].mxu0
  %1077 = vmatprep.mubr.f32.mxu0 0.0
  %1078 = vmatmul.mubr.f32.gmra.mrb[0].mxu0 %v781
  %v1079 = vpop.f32.mrb[0].mxu0
  %v1080 = vadd.f32 0.0, %v1079
  %v1081 = vpop.f32.mrb[0].mxu0
  %1082 = vmatprep.mubr.f32.mxu0 0.0
  %1083 = vmatmul.mubr.f32.gmra.mrb[0].mxu0 %v782
  %v1084 = vpop.f32.mrb[0].mxu0
  %v1085 = vadd.f32 0.0, %v1084
  %v1086 = vpop.f32.mrb[0].mxu0
  %1087 = vdwg.mxu0
  %1088 = vmatprep.subr.mxu0 0.0
  %1089 = vmatpush1.msra.mxu0 %v866
  %1090 = vmatprep.subr.mxu0 0.0
  %1091 = vmatpush1.msra.mxu0 %v871
  %1092 = vmatprep.subr.mxu0 0.0
  %1093 = vmatpush1.msra.mxu0 %v876
  %1094 = vmatprep.subr.mxu0 0.0
  %1095 = vmatpush1.msra.mxu0 %v881
  %1096 = vmatprep.subr.mxu0 0.0
  %1097 = vmatpush1.msra.mxu0 0.0
  %1098 = vmatprep.subr.mxu0 0.0
  %1099 = vmatpush1.msra.mxu0 0.0
  %1100 = vmatprep.subr.mxu0 0.0
  %1101 = vmatpush1.msra.mxu0 0.0
  %1102 = vmatprep.subr.mxu0 0.0
  %1103 = vmatpush1.msra.mxu0 0.0
  %1104 = vmatprep.subr.mxu0 0.0
  %1105 = vmatpush1.msra.mxu0 0.0
  %1106 = vmatprep.subr.mxu0 0.0
  %1107 = vmatpush1.msra.mxu0 0.0
  %1108 = vmatprep.subr.mxu0 0.0
  %1109 = vmatpush1.msra.mxu0 0.0
  %1110 = vmatprep.subr.mxu0 0.0
  %1111 = vmatpush1.msra.mxu0 0.0
  %1112 = vmatprep.subr.mxu0 0.0
  %1113 = vmatpush1.msra.mxu0 0.0
  %1114 = vmatprep.subr.mxu0 0.0
  %1115 = vmatpush1.msra.mxu0 0.0
  %1116 = vmatprep.subr.mxu0 0.0
  %1117 = vmatpush1.msra.mxu0 0.0
  %1118 = vmatprep.subr.mxu0 0.0
  %1119 = vmatpush1.msra.mxu0 0.0
  %1120 = vmatprep.subr.mxu0 0.0
  %1121 = vmatpush1.msra.mxu0 0.0
  %1122 = vmatprep.subr.mxu0 0.0
  %1123 = vmatpush1.msra.mxu0 0.0
  %1124 = vmatprep.subr.mxu0 0.0
  %1125 = vmatpush1.msra.mxu0 0.0
  %1126 = vmatprep.subr.mxu0 0.0
  %1127 = vmatpush1.msra.mxu0 0.0
  %1128 = vmatprep.subr.mxu0 0.0
  %1129 = vmatpush1.msra.mxu0 0.0
  %1130 = vmatprep.subr.mxu0 0.0
  %1131 = vmatpush1.msra.mxu0 0.0
  %1132 = vmatprep.subr.mxu0 0.0
  %1133 = vmatpush1.msra.mxu0 0.0
  %1134 = vmatprep.subr.mxu0 0.0
  %1135 = vmatpush1.msra.mxu0 0.0
  %1136 = vmatprep.subr.mxu0 0.0
  %1137 = vmatpush1.msra.mxu0 0.0
  %1138 = vmatprep.subr.mxu0 0.0
  %1139 = vmatpush1.msra.mxu0 0.0
  %1140 = vmatprep.subr.mxu0 0.0
  %1141 = vmatpush1.msra.mxu0 0.0
  %1142 = vmatprep.subr.mxu0 0.0
  %1143 = vmatpush1.msra.mxu0 0.0
  %1144 = vmatprep.subr.mxu0 0.0
  %1145 = vmatpush1.msra.mxu0 0.0
  %1146 = vmatprep.subr.mxu0 0.0
  %1147 = vmatpush1.msra.mxu0 0.0
  %1148 = vmatprep.subr.mxu0 0.0
  %1149 = vmatpush1.msra.mxu0 0.0
  %1150 = vmatprep.subr.mxu0 0.0
  %1151 = vmatpush1.msra.mxu0 0.0
  %1152 = vmatprep.mubr.f32.mxu0 0.0
  %1153 = vmatmul.mubr.f32.gmra.mrb[0].mxu0 %v359
  %v1154 = vpop.f32.mrb[0].mxu0
  %v1155 = vadd.f32 %v968, %v1154
  %v1156 = vpop.f32.mrb[0].mxu0
  %1157 = vmatprep.mubr.f32.mxu0 0.0
  %1158 = vmatmul.mubr.f32.gmra.mrb[0].mxu0 %v362
  %v1159 = vpop.f32.mrb[0].mxu0
  %v1160 = vadd.f32 %v973, %v1159
  %v1161 = vpop.f32.mrb[0].mxu0
  %1162 = vmatprep.mubr.f32.mxu0 0.0
  %1163 = vmatmul.mubr.f32.gmra.mrb[0].mxu0 %v365
  %v1164 = vpop.f32.mrb[0].mxu0
  %v1165 = vadd.f32 %v978, %v1164
  %v1166 = vpop.f32.mrb[0].mxu0
  %1167 = vmatprep.mubr.f32.mxu0 0.0
  %1168 = vmatmul.mubr.f32.gmra.mrb[0].mxu0 %v368
  %v1169 = vpop.f32.mrb[0].mxu0
  %v1170 = vadd.f32 %v983, %v1169
  %v1171 = vpop.f32.mrb[0].mxu0
  %1172 = vdwg.mxu0
  %1173 = vmatprep.subr.mxu0 0.0
  %1174 = vmatpush1.msra.mxu0 %v1070
  %1175 = vmatprep.subr.mxu0 0.0
  %1176 = vmatpush1.msra.mxu0 %v1075
  %1177 = vmatprep.subr.mxu0 0.0
  %1178 = vmatpush1.msra.mxu0 %v1080
  %1179 = vmatprep.subr.mxu0 0.0
  %1180 = vmatpush1.msra.mxu0 %v1085
  %1181 = vmatprep.subr.mxu0 0.0
  %1182 = vmatpush1.msra.mxu0 0.0
  %1183 = vmatprep.subr.mxu0 0.0
  %1184 = vmatpush1.msra.mxu0 0.0
  %1185 = vmatprep.subr.mxu0 0.0
  %1186 = vmatpush1.msra.mxu0 0.0
  %1187 = vmatprep.subr.mxu0 0.0
  %1188 = vmatpush1.msra.mxu0 0.0
  %1189 = vmatprep.subr.mxu0 0.0
  %1190 = vmatpush1.msra.mxu0 0.0
  %1191 = vmatprep.subr.mxu0 0.0
  %1192 = vmatpush1.msra.mxu0 0.0
  %1193 = vmatprep.subr.mxu0 0.0
  %1194 = vmatpush1.msra.mxu0 0.0
  %1195 = vmatprep.subr.mxu0 0.0
  %1196 = vmatpush1.msra.mxu0 0.0
  %1197 = vmatprep.subr.mxu0 0.0
  %1198 = vmatpush1.msra.mxu0 0.0
  %1199 = vmatprep.subr.mxu0 0.0
  %1200 = vmatpush1.msra.mxu0 0.0
  %1201 = vmatprep.subr.mxu0 0.0
  %1202 = vmatpush1.msra.mxu0 0.0
  %1203 = vmatprep.subr.mxu0 0.0
  %1204 = vmatpush1.msra.mxu0 0.0
  %1205 = vmatprep.subr.mxu0 0.0
  %1206 = vmatpush1.msra.mxu0 0.0
  %1207 = vmatprep.subr.mxu0 0.0
  %1208 = vmatpush1.msra.mxu0 0.0
  %1209 = vmatprep.subr.mxu0 0.0
  %1210 = vmatpush1.msra.mxu0 0.0
  %1211 = vmatprep.subr.mxu0 0.0
  %1212 = vmatpush1.msra.mxu0 0.0
  %1213 = vmatprep.subr.mxu0 0.0
  %1214 = vmatpush1.msra.mxu0 0.0
  %1215 = vmatprep.subr.mxu0 0.0
  %1216 = vmatpush1.msra.mxu0 0.0
  %1217 = vmatprep.subr.mxu0 0.0
  %1218 = vmatpush1.msra.mxu0 0.0
  %1219 = vmatprep.subr.mxu0 0.0
  %1220 = vmatpush1.msra.mxu0 0.0
  %1221 = vmatprep.subr.mxu0 0.0
  %1222 = vmatpush1.msra.mxu0 0.0
  %1223 = vmatprep.subr.mxu0 0.0
  %1224 = vmatpush1.msra.mxu0 0.0
  %1225 = vmatprep.subr.mxu0 0.0
  %1226 = vmatpush1.msra.mxu0 0.0
  %1227 = vmatprep.subr.mxu0 0.0
  %1228 = vmatpush1.msra.mxu0 0.0
  %1229 = vmatprep.subr.mxu0 0.0
  %1230 = vmatpush1.msra.mxu0 0.0
  %1231 = vmatprep.subr.mxu0 0.0
  %1232 = vmatpush1.msra.mxu0 0.0
  %1233 = vmatprep.subr.mxu0 0.0
  %1234 = vmatpush1.msra.mxu0 0.0
  %1235 = vmatprep.subr.mxu0 0.0
  %1236 = vmatpush1.msra.mxu0 0.0
  %1237 = vmatprep.mubr.f32.mxu0 0.0
  %1238 = vmatmul.mubr.f32.gmra.mrb[0].mxu0 %v456
  %v1239 = vpop.f32.mrb[0].mxu0
  %v1240 = vadd.f32 0.0, %v1239
  %v1241 = vpop.f32.mrb[0].mxu0
  %1242 = vmatprep.mubr.f32.mxu0 0.0
  %1243 = vmatmul.mubr.f32.gmra.mrb[0].mxu0 %v459
  %v1244 = vpop.f32.mrb[0].mxu0
  %v1245 = vadd.f32 0.0, %v1244
  %v1246 = vpop.f32.mrb[0].mxu0
  %1247 = vmatprep.mubr.f32.mxu0 0.0
  %1248 = vmatmul.mubr.f32.gmra.mrb[0].mxu0 %v462
  %v1249 = vpop.f32.mrb[0].mxu0
  %v1250 = vadd.f32 0.0, %v1249
  %v1251 = vpop.f32.mrb[0].mxu0
  %1252 = vmatprep.mubr.f32.mxu0 0.0
  %1253 = vmatmul.mubr.f32.gmra.mrb[0].mxu0 %v465
  %v1254 = vpop.f32.mrb[0].mxu0
  %v1255 = vadd.f32 0.0, %v1254
  %v1256 = vpop.f32.mrb[0].mxu0
  %1257 = vdwg.mxu0
  %v1258 = vadd.f32 %v1155, %v1240
  %v1259 = vadd.f32 %v1160, %v1245
  %v1260 = vadd.f32 %v1165, %v1250
  %v1261 = vadd.f32 %v1170, %v1255
  %1262 = vmatprep.subr.mxu0 0.0
  %1263 = vmatpush1.msra.mxu0 %v43
  %1264 = vmatprep.subr.mxu0 0.0
  %1265 = vmatpush1.msra.mxu0 %v44
  %1266 = vmatprep.subr.mxu0 0.0
  %1267 = vmatpush1.msra.mxu0 %v45
  %1268 = vmatprep.subr.mxu0 0.0
  %1269 = vmatpush1.msra.mxu0 %v46
  %1270 = vmatprep.subr.mxu0 0.0
  %1271 = vmatpush1.msra.mxu0 %v47
  %1272 = vmatprep.subr.mxu0 0.0
  %1273 = vmatpush1.msra.mxu0 %v48
  %1274 = vmatprep.subr.mxu0 0.0
  %1275 = vmatpush1.msra.mxu0 %v49
  %1276 = vmatprep.subr.mxu0 0.0
  %1277 = vmatpush1.msra.mxu0 %v50
  %1278 = vmatprep.subr.mxu0 0.0
  %1279 = vmatpush1.msra.mxu0 %v51
  %1280 = vmatprep.subr.mxu0 0.0
  %1281 = vmatpush1.msra.mxu0 %v52
  %1282 = vmatprep.subr.mxu0 0.0
  %1283 = vmatpush1.msra.mxu0 %v53
  %1284 = vmatprep.subr.mxu0 0.0
  %1285 = vmatpush1.msra.mxu0 %v54
  %1286 = vmatprep.subr.mxu0 0.0
  %1287 = vmatpush1.msra.mxu0 %v55
  %1288 = vmatprep.subr.mxu0 0.0
  %1289 = vmatpush1.msra.mxu0 %v56
  %1290 = vmatprep.subr.mxu0 0.0
  %1291 = vmatpush1.msra.mxu0 %v57
  %1292 = vmatprep.subr.mxu0 0.0
  %1293 = vmatpush1.msra.mxu0 %v58
  %1294 = vmatprep.subr.mxu0 0.0
  %1295 = vmatpush1.msra.mxu0 0.0
  %1296 = vmatprep.subr.mxu0 0.0
  %1297 = vmatpush1.msra.mxu0 0.0
  %1298 = vmatprep.subr.mxu0 0.0
  %1299 = vmatpush1.msra.mxu0 0.0
  %1300 = vmatprep.subr.mxu0 0.0
  %1301 = vmatpush1.msra.mxu0 0.0
  %1302 = vmatprep.subr.mxu0 0.0
  %1303 = vmatpush1.msra.mxu0 0.0
  %1304 = vmatprep.subr.mxu0 0.0
  %1305 = vmatpush1.msra.mxu0 0.0
  %1306 = vmatprep.subr.mxu0 0.0
  %1307 = vmatpush1.msra.mxu0 0.0
  %1308 = vmatprep.subr.mxu0 0.0
  %1309 = vmatpush1.msra.mxu0 0.0
  %1310 = vmatprep.subr.mxu0 0.0
  %1311 = vmatpush1.msra.mxu0 0.0
  %1312 = vmatprep.subr.mxu0 0.0
  %1313 = vmatpush1.msra.mxu0 0.0
  %1314 = vmatprep.subr.mxu0 0.0
  %1315 = vmatpush1.msra.mxu0 0.0
  %1316 = vmatprep.subr.mxu0 0.0
  %1317 = vmatpush1.msra.mxu0 0.0
  %1318 = vmatprep.subr.mxu0 0.0
  %1319 = vmatpush1.msra.mxu0 0.0
  %1320 = vmatprep.subr.mxu0 0.0
  %1321 = vmatpush1.msra.mxu0 0.0
  %1322 = vmatprep.subr.mxu0 0.0
  %1323 = vmatpush1.msra.mxu0 0.0
  %1324 = vmatprep.subr.mxu0 0.0
  %1325 = vmatpush1.msra.mxu0 0.0
  %1326 = vmatprep.mubr.f32.mxu0 0.0
  %1327 = vmatmul.mubr.f32.gmra.mrb[0].mxu0 %v1258
  %v1328 = vpop.f32.mrb[0].mxu0
  %v1329 = vadd.f32 0.0, %v1328
  %v1330 = vpop.f32.mrb[0].mxu0
  %1331 = vmatprep.mubr.f32.mxu0 0.0
  %1332 = vmatmul.mubr.f32.gmra.mrb[0].mxu0 %v1259
  %v1333 = vpop.f32.mrb[0].mxu0
  %v1334 = vadd.f32 0.0, %v1333
  %v1335 = vpop.f32.mrb[0].mxu0
  %1336 = vmatprep.mubr.f32.mxu0 0.0
  %1337 = vmatmul.mubr.f32.gmra.mrb[0].mxu0 %v1260
  %v1338 = vpop.f32.mrb[0].mxu0
  %v1339 = vadd.f32 0.0, %v1338
  %v1340 = vpop.f32.mrb[0].mxu0
  %1341 = vmatprep.mubr.f32.mxu0 0.0
  %1342 = vmatmul.mubr.f32.gmra.mrb[0].mxu0 %v1261
  %v1343 = vpop.f32.mrb[0].mxu0
  %v1344 = vadd.f32 0.0, %v1343
  %v1345 = vpop.f32.mrb[0].mxu0
  %1346 = vdwg.mxu0
  %v1347 = vadd.f32 %v1329, %v1334
  %v1348 = vadd.f32 %v1347, %v1339
  %v1349 = vadd.f32 %v1348, %v1344
  %v1350 = vrot.slane %v1349, 4
  %v1351 = vadd.f32 %v1349, %v1350
  %v1352 = vrot.slane %v1351, 2
  %v1353 = vadd.f32 %v1351, %v1352
  %v1354 = vrot.slane %v1353, 1
  %v1355 = vadd.f32 %v1353, %v1354
  %v1356 = vmul.f32 %v1355, 0.001953125
  %v1357 = vmul.f32 %v1258, %v1258
  %v1358 = vmul.f32 %v1259, %v1259
  %v1359 = vmul.f32 %v1260, %v1260
  %v1360 = vmul.f32 %v1261, %v1261
  %1361 = vmatprep.subr.mxu0 0.0
  %1362 = vmatpush1.msra.mxu0 %v43
  %1363 = vmatprep.subr.mxu0 0.0
  %1364 = vmatpush1.msra.mxu0 %v44
  %1365 = vmatprep.subr.mxu0 0.0
  %1366 = vmatpush1.msra.mxu0 %v45
  %1367 = vmatprep.subr.mxu0 0.0
  %1368 = vmatpush1.msra.mxu0 %v46
  %1369 = vmatprep.subr.mxu0 0.0
  %1370 = vmatpush1.msra.mxu0 %v47
  %1371 = vmatprep.subr.mxu0 0.0
  %1372 = vmatpush1.msra.mxu0 %v48
  %1373 = vmatprep.subr.mxu0 0.0
  %1374 = vmatpush1.msra.mxu0 %v49
  %1375 = vmatprep.subr.mxu0 0.0
  %1376 = vmatpush1.msra.mxu0 %v50
  %1377 = vmatprep.subr.mxu0 0.0
  %1378 = vmatpush1.msra.mxu0 %v51
  %1379 = vmatprep.subr.mxu0 0.0
  %1380 = vmatpush1.msra.mxu0 %v52
  %1381 = vmatprep.subr.mxu0 0.0
  %1382 = vmatpush1.msra.mxu0 %v53
  %1383 = vmatprep.subr.mxu0 0.0
  %1384 = vmatpush1.msra.mxu0 %v54
  %1385 = vmatprep.subr.mxu0 0.0
  %1386 = vmatpush1.msra.mxu0 %v55
  %1387 = vmatprep.subr.mxu0 0.0
  %1388 = vmatpush1.msra.mxu0 %v56
  %1389 = vmatprep.subr.mxu0 0.0
  %1390 = vmatpush1.msra.mxu0 %v57
  %1391 = vmatprep.subr.mxu0 0.0
  %1392 = vmatpush1.msra.mxu0 %v58
  %1393 = vmatprep.subr.mxu0 0.0
  %1394 = vmatpush1.msra.mxu0 0.0
  %1395 = vmatprep.subr.mxu0 0.0
  %1396 = vmatpush1.msra.mxu0 0.0
  %1397 = vmatprep.subr.mxu0 0.0
  %1398 = vmatpush1.msra.mxu0 0.0
  %1399 = vmatprep.subr.mxu0 0.0
  %1400 = vmatpush1.msra.mxu0 0.0
  %1401 = vmatprep.subr.mxu0 0.0
  %1402 = vmatpush1.msra.mxu0 0.0
  %1403 = vmatprep.subr.mxu0 0.0
  %1404 = vmatpush1.msra.mxu0 0.0
  %1405 = vmatprep.subr.mxu0 0.0
  %1406 = vmatpush1.msra.mxu0 0.0
  %1407 = vmatprep.subr.mxu0 0.0
  %1408 = vmatpush1.msra.mxu0 0.0
  %1409 = vmatprep.subr.mxu0 0.0
  %1410 = vmatpush1.msra.mxu0 0.0
  %1411 = vmatprep.subr.mxu0 0.0
  %1412 = vmatpush1.msra.mxu0 0.0
  %1413 = vmatprep.subr.mxu0 0.0
  %1414 = vmatpush1.msra.mxu0 0.0
  %1415 = vmatprep.subr.mxu0 0.0
  %1416 = vmatpush1.msra.mxu0 0.0
  %1417 = vmatprep.subr.mxu0 0.0
  %1418 = vmatpush1.msra.mxu0 0.0
  %1419 = vmatprep.subr.mxu0 0.0
  %1420 = vmatpush1.msra.mxu0 0.0
  %1421 = vmatprep.subr.mxu0 0.0
  %1422 = vmatpush1.msra.mxu0 0.0
  %1423 = vmatprep.subr.mxu0 0.0
  %1424 = vmatpush1.msra.mxu0 0.0
  %1425 = vmatprep.mubr.f32.mxu0 0.0
  %1426 = vmatmul.mubr.f32.gmra.mrb[0].mxu0 %v1357
  %v1427 = vpop.f32.mrb[0].mxu0
  %v1428 = vadd.f32 0.0, %v1427
  %v1429 = vpop.f32.mrb[0].mxu0
  %1430 = vmatprep.mubr.f32.mxu0 0.0
  %1431 = vmatmul.mubr.f32.gmra.mrb[0].mxu0 %v1358
  %v1432 = vpop.f32.mrb[0].mxu0
  %v1433 = vadd.f32 0.0, %v1432
  %v1434 = vpop.f32.mrb[0].mxu0
  %1435 = vmatprep.mubr.f32.mxu0 0.0
  %1436 = vmatmul.mubr.f32.gmra.mrb[0].mxu0 %v1359
  %v1437 = vpop.f32.mrb[0].mxu0
  %v1438 = vadd.f32 0.0, %v1437
  %v1439 = vpop.f32.mrb[0].mxu0
  %1440 = vmatprep.mubr.f32.mxu0 0.0
  %1441 = vmatmul.mubr.f32.gmra.mrb[0].mxu0 %v1360
  %v1442 = vpop.f32.mrb[0].mxu0
  %v1443 = vadd.f32 0.0, %v1442
  %v1444 = vpop.f32.mrb[0].mxu0
  %1445 = vdwg.mxu0
  %v1446 = vadd.f32 %v1428, %v1433
  %v1447 = vadd.f32 %v1446, %v1438
  %v1448 = vadd.f32 %v1447, %v1443
  %v1449 = vrot.slane %v1448, 4
  %v1450 = vadd.f32 %v1448, %v1449
  %v1451 = vrot.slane %v1450, 2
  %v1452 = vadd.f32 %v1450, %v1451
  %v1453 = vrot.slane %v1452, 1
  %v1454 = vadd.f32 %v1452, %v1453
  %v1455 = vmul.f32 %v1454, 0.001953125
  %v1456 = vmul.f32 %v1356, %v1356
  %v1457 = vsub.f32 %v1455, %v1456
  %v1458 = vld [vmem:[%s8] sm:$0x1]
  %v1459 = vadd.f32 %v1457, 1e-05
  %v1460 = vrsqrt.pop %v1459
  %v1461 = vmul.f32 %v1458, %v1460
  %v1462 = vld [vmem:[%s9] sm:$0x1]
  %v1463 = vmul.f32 %v1356, %v1461
  %v1464 = vsub.f32 %v1462, %v1463
  %v1466 = vlaneseq
  %v1467 = vshrl.u32 %v1466, 7
  %v1468 = vsub.s32 0, %v1467
  %v1469 = vrot.slane %v1461, %v1468
  %v1471 = vmul.f32 %v1258, %v1469
  %v1472 = vmul.f32 %v1259, %v1469
  %v1473 = vmul.f32 %v1260, %v1469
  %v1474 = vmul.f32 %v1261, %v1469
  %v1476 = vlaneseq
  %v1477 = vshrl.u32 %v1476, 7
  %v1478 = vsub.s32 0, %v1477
  %v1479 = vrot.slane %v1464, %v1478
  %v1481 = vadd.f32 %v1471, %v1479
  %v1482 = vadd.f32 %v1472, %v1479
  %v1483 = vadd.f32 %v1473, %v1479
  %v1484 = vadd.f32 %v1474, %v1479
  %v1485 = vmax.f32 %v1481, 0.0
  %v1486 = vmax.f32 %v1482, 0.0
  %v1487 = vmax.f32 %v1483, 0.0
  %v1488 = vmax.f32 %v1484, 0.0
  %1489 = vst [vmem:[%s10] sm:$0xff] %v1485
  %1490 = vst [vmem:[%s10 + $0x8] sm:$0xff] %v1486
  %1491 = vst [vmem:[%s10 + $0x10] sm:$0xff] %v1487
  %1492 = vst [vmem:[%s10 + $0x18] sm:$0xff] %v1488
  // Predicated region
  $region42: #{double_conv.1} parent=0 // pred_check
    _
  $region43: #{double_conv.1} parent=0 // pred_check_branch
    %1494 = sbr.rel (0) target = $region45
  $region44: #{double_conv.1} parent=0 // pred_region
    _
  $region45: #{double_conv.1} parent=0 // pred_fallthru
    _
  // Predicated region
  $region46: #{double_conv.1} parent=0 // pred_check
    _
  $region47: #{double_conv.1} parent=0 // pred_check_branch
    %1496 = sbr.rel (0) target = $region49
  $region48: #{double_conv.1} parent=0 // pred_region
    _
  $region49: #{double_conv.1} parent=0 // pred_fallthru
    _

</llo_original>
